<compile_context>
chip_gen: v7x
topology: tpu7x:2x2x1
jax: 0.10.0
libtpu: 0.0.40
codegen_flags: <defaults>
</compile_context>

<pallas_src>
import functools

import jax
import jax.numpy as jnp
from jax import lax
from jax.experimental import pallas as pl
from jax.experimental.pallas import tpu as pltpu


def _regressor_kernel(s_ref, a_ref, w1s_ref, w1a_ref, b1_ref,
                      w2_ref, b2_ref, w3_ref, b3_ref, o_ref):
    """One batch tile of the 3-layer MLP.

    s_ref: [bm, S]   a_ref: [bm, A]
    w1s:   [S, 64]   w1a:   [A, 64]   b1: [1, 64]
    w2:    [64, 64]  b2:    [1, 64]
    w3:    [1, 64] (row vector, transposed l3 weight)   b3: [1, 1]
    o_ref: [1, 1, bm]  (lane-dense: one q value per lane)
    """
    hp = lax.Precision.HIGHEST

    # Layer 1: the concat([state, action]) is fused into two partial matmuls,
    # so the [B, S+A] concatenated array never exists in HBM.
    h1 = jnp.dot(s_ref[...], w1s_ref[...], precision=hp,
                 preferred_element_type=jnp.float32)
    h1 = h1 + jnp.dot(a_ref[...], w1a_ref[...], precision=hp,
                      preferred_element_type=jnp.float32)
    h1 = jnp.maximum(h1 + b1_ref[...], 0.0)

    # Layer 2
    h2 = jnp.dot(h1, w2_ref[...], precision=hp,
                 preferred_element_type=jnp.float32)
    h2 = jnp.maximum(h2 + b2_ref[...], 0.0)

    # Layer 3 (out_features == 1): contract against the transposed activations
    # (w3_row @ h2^T) so the result is a lane-dense [1, bm] row -> unmasked
    # 128-wide vector stores instead of a [bm, 1] column of masked stores.
    q = lax.dot_general(w3_ref[...], h2,
                        dimension_numbers=(((1,), (1,)), ((), ())),
                        precision=hp,
                        preferred_element_type=jnp.float32)        # [1, bm]
    q = q + b3_ref[...]                                            # + b3 (1,1)

    o_ref[...] = q.reshape(o_ref.shape).astype(o_ref.dtype)


@functools.partial(jax.jit, static_argnames=("block_m",))
def regressor_forward(state, action, params, *, block_m=512):
    """Pallas Regressor forward. state: [B, S], action: [B, A] -> [B, 1]."""
    w1, b1, w2, b2, w3, b3 = (params["w1"], params["b1"], params["w2"],
                              params["b2"], params["w3"], params["b3"])
    B, S = state.shape
    A = action.shape[1]
    H = w1.shape[1]
    assert block_m % 8 == 0, "block_m must be a multiple of 8 (TPU sublane)."

    # Big batch tile to fill MXU rows and amortize per-step grid overhead,
    # but never larger than the batch itself (no padding copy of the inputs).
    bm = block_m if B >= block_m else B
    grid_m = pl.cdiv(B, bm)   # partial last block is handled by Pallas masking

    # Split W1 along its input dim so the kernel consumes state/action directly.
    w1s = w1[:S]
    w1a = w1[S:]
    w3_row = w3.reshape(1, H)   # [H, 1] -> [1, H]

    out = pl.pallas_call(
        _regressor_kernel,
        out_shape=jax.ShapeDtypeStruct((grid_m, 1, bm), jnp.float32),
        grid_spec=pltpu.PrefetchScalarGridSpec(
            num_scalar_prefetch=0,
            grid=(grid_m,),
            in_specs=[
                pl.BlockSpec((bm, S), lambda i: (i, 0)),   # state tile (streamed)
                pl.BlockSpec((bm, A), lambda i: (i, 0)),   # action tile (streamed)
                pl.BlockSpec((S, H), lambda i: (0, 0)),    # W1[:S]   (invariant)
                pl.BlockSpec((A, H), lambda i: (0, 0)),    # W1[S:]   (invariant)
                pl.BlockSpec((1, H), lambda i: (0, 0)),    # b1
                pl.BlockSpec((H, H), lambda i: (0, 0)),    # W2
                pl.BlockSpec((1, H), lambda i: (0, 0)),    # b2
                pl.BlockSpec((1, H), lambda i: (0, 0)),    # W3 row
                pl.BlockSpec((1, 1), lambda i: (0, 0)),    # b3
            ],
            out_specs=pl.BlockSpec((1, 1, bm), lambda i: (i, 0, 0)),
        ),
        compiler_params=pltpu.CompilerParams(
            dimension_semantics=("parallel",)),
    )(state, action, w1s, w1a, b1, w2, b2, w3_row, b3)

    # (grid_m, 1, bm) lane-major blocks -> flat row order -> [B, 1]
    return out.reshape(grid_m * bm)[:B].reshape(B, 1)


def init_regressor_params(key, state_dim, action_dim, hidden=64):
    """Deterministic init mirroring nn.Linear default (U[-1/sqrt(fan_in), ...])."""
    d_in = state_dim + action_dim
    ks = jax.random.split(key, 6)

    def lin(kw, kb, fan_in, fan_out):
        bound = 1.0 / jnp.sqrt(jnp.float32(fan_in))
        w = jax.random.uniform(kw, (fan_in, fan_out), jnp.float32, -bound, bound)
        b = jax.random.uniform(kb, (1, fan_out), jnp.float32, -bound, bound)
        return w, b

    w1, b1 = lin(ks[0], ks[1], d_in, hidden)
    w2, b2 = lin(ks[2], ks[3], hidden, hidden)
    w3, b3 = lin(ks[4], ks[5], hidden, 1)
    return dict(w1=w1, b1=b1, w2=w2, b2=b2, w3=w3, b3=b3)


def regressor_reference(state, action, params):
    """Pure-JAX reference for correctness check (full f32 matmuls)."""
    hp = lax.Precision.HIGHEST
    sa = jnp.concatenate([state, action], axis=1)
    h1 = jax.nn.relu(jnp.dot(sa, params["w1"], precision=hp) + params["b1"])
    h2 = jax.nn.relu(jnp.dot(h1, params["w2"], precision=hp) + params["b2"])
    return jnp.dot(h2, params["w3"], precision=hp) + params["b3"]


if __name__ == "__main__":
    key = jax.random.PRNGKey(0)
    k_p, k_s, k_a = jax.random.split(key, 3)

    state_dim, action_dim = 8, 4
    params = init_regressor_params(k_p, state_dim, action_dim)

    # Small single-block case (B < block_m -> one grid step, bm == B).
    batch = 8
    state = jax.random.normal(k_s, (batch, state_dim), jnp.float32)
    action = jax.random.normal(k_a, (batch, action_dim), jnp.float32)

    out = jax.block_until_ready(regressor_forward(state, action, params))
    ref = regressor_reference(state, action, params)
    assert out.shape == (batch, 1), out.shape
    assert jnp.allclose(out, ref, atol=1e-4, rtol=1e-4), (
        f"max abs err {jnp.max(jnp.abs(out - ref))}")

    # Multi-block case (exercises grid > 1 and 128-lane-dense output stores).
    batch2 = 256
    state2 = jax.random.normal(k_s, (batch2, state_dim), jnp.float32)
    action2 = jax.random.normal(k_a, (batch2, action_dim), jnp.float32)
    out2 = jax.block_until_ready(
        regressor_forward(state2, action2, params, block_m=128))
    ref2 = regressor_reference(state2, action2, params)
    assert out2.shape == (batch2, 1), out2.shape
    assert jnp.allclose(out2, ref2, atol=1e-4, rtol=1e-4), (
        f"max abs err {jnp.max(jnp.abs(out2 - ref2))}")

    print("KERNEL_OK")
</pallas_src>

<mosaic_0001>
module attributes {stable_mosaic.version = 11 : i64} {
  func.func @_regressor_kernel(%arg0: i32, %arg1: memref<8x8xf32, #tpu.memory_space<vmem>>, %arg2: memref<8x4xf32, #tpu.memory_space<vmem>>, %arg3: memref<8x64xf32, #tpu.memory_space<vmem>>, %arg4: memref<4x64xf32, #tpu.memory_space<vmem>>, %arg5: memref<1x64xf32, #tpu.memory_space<vmem>>, %arg6: memref<64x64xf32, #tpu.memory_space<vmem>>, %arg7: memref<1x64xf32, #tpu.memory_space<vmem>>, %arg8: memref<1x64xf32, #tpu.memory_space<vmem>>, %arg9: memref<1x1xf32, #tpu.memory_space<vmem>>, %arg10: memref<1x1x8xf32, #tpu.memory_space<vmem>>) attributes {dimension_semantics = [#tpu.dimension_semantics<parallel>], iteration_bounds = array<i64: 1>, scalar_prefetch = 0 : i64, scratch_operands = 0 : i64, tpu.core_type = #tpu.core_type<tc>, window_params = [{transform_indices = @transform_0, window_bounds = array<i64: 8, 8>}, {transform_indices = @transform_1, window_bounds = array<i64: 8, 4>}, {pipeline_mode = #tpu.pipeline_mode<synchronous>, transform_indices = @transform_2, window_bounds = array<i64: 8, 64>}, {pipeline_mode = #tpu.pipeline_mode<synchronous>, transform_indices = @transform_3, window_bounds = array<i64: 4, 64>}, {pipeline_mode = #tpu.pipeline_mode<synchronous>, transform_indices = @transform_4, window_bounds = array<i64: 1, 64>}, {pipeline_mode = #tpu.pipeline_mode<synchronous>, transform_indices = @transform_5, window_bounds = array<i64: 64, 64>}, {pipeline_mode = #tpu.pipeline_mode<synchronous>, transform_indices = @transform_6, window_bounds = array<i64: 1, 64>}, {pipeline_mode = #tpu.pipeline_mode<synchronous>, transform_indices = @transform_7, window_bounds = array<i64: 1, 64>}, {pipeline_mode = #tpu.pipeline_mode<synchronous>, transform_indices = @transform_8, window_bounds = array<i64: 1, 1>}, {transform_indices = @transform_9, window_bounds = array<i64: 1, 1, 8>}]} {
    %c0 = arith.constant 0 : index
    %c0_0 = arith.constant 0 : index
    %0 = vector.load %arg1[%c0, %c0_0] : memref<8x8xf32, #tpu.memory_space<vmem>>, vector<8x8xf32>
    %c0_1 = arith.constant 0 : index
    %c0_2 = arith.constant 0 : index
    %1 = vector.load %arg3[%c0_1, %c0_2] : memref<8x64xf32, #tpu.memory_space<vmem>>, vector<8x64xf32>
    %cst = arith.constant dense<0.000000e+00> : vector<8x64xf32>
    %2 = tpu.matmul %0, %1, %cst {dimension_numbers = #tpu.dot_dimension_numbers<[1], [0], [0], [1], [0, 0, 1, 1], [], []>, precision = #tpu.contract_precision<fp32>} : vector<8x8xf32>, vector<8x64xf32>, vector<8x64xf32> -> vector<8x64xf32>
    %c0_3 = arith.constant 0 : index
    %c0_4 = arith.constant 0 : index
    %3 = vector.load %arg2[%c0_3, %c0_4] : memref<8x4xf32, #tpu.memory_space<vmem>>, vector<8x4xf32>
    %c0_5 = arith.constant 0 : index
    %c0_6 = arith.constant 0 : index
    %4 = vector.load %arg4[%c0_5, %c0_6] : memref<4x64xf32, #tpu.memory_space<vmem>>, vector<4x64xf32>
    %cst_7 = arith.constant dense<0.000000e+00> : vector<8x64xf32>
    %5 = tpu.matmul %3, %4, %cst_7 {dimension_numbers = #tpu.dot_dimension_numbers<[1], [0], [0], [1], [0, 0, 1, 1], [], []>, precision = #tpu.contract_precision<fp32>} : vector<8x4xf32>, vector<4x64xf32>, vector<8x64xf32> -> vector<8x64xf32>
    %6 = arith.addf %2, %5 : vector<8x64xf32>
    %c0_8 = arith.constant 0 : index
    %c0_9 = arith.constant 0 : index
    %7 = vector.load %arg5[%c0_8, %c0_9] : memref<1x64xf32, #tpu.memory_space<vmem>>, vector<1x64xf32>
    %8 = vector.broadcast %7 : vector<1x64xf32> to vector<8x64xf32>
    %9 = arith.addf %6, %8 : vector<8x64xf32>
    %cst_10 = arith.constant 0.000000e+00 : f32
    %10 = vector.broadcast %cst_10 : f32 to vector<8x64xf32>
    %11 = arith.maximumf %9, %10 : vector<8x64xf32>
    %c0_11 = arith.constant 0 : index
    %c0_12 = arith.constant 0 : index
    %12 = vector.load %arg6[%c0_11, %c0_12] : memref<64x64xf32, #tpu.memory_space<vmem>>, vector<64x64xf32>
    %cst_13 = arith.constant dense<0.000000e+00> : vector<8x64xf32>
    %13 = tpu.matmul %11, %12, %cst_13 {dimension_numbers = #tpu.dot_dimension_numbers<[1], [0], [0], [1], [0, 0, 1, 1], [], []>, precision = #tpu.contract_precision<fp32>} : vector<8x64xf32>, vector<64x64xf32>, vector<8x64xf32> -> vector<8x64xf32>
    %c0_14 = arith.constant 0 : index
    %c0_15 = arith.constant 0 : index
    %14 = vector.load %arg7[%c0_14, %c0_15] : memref<1x64xf32, #tpu.memory_space<vmem>>, vector<1x64xf32>
    %15 = vector.broadcast %14 : vector<1x64xf32> to vector<8x64xf32>
    %16 = arith.addf %13, %15 : vector<8x64xf32>
    %cst_16 = arith.constant 0.000000e+00 : f32
    %17 = vector.broadcast %cst_16 : f32 to vector<8x64xf32>
    %18 = arith.maximumf %16, %17 : vector<8x64xf32>
    %c0_17 = arith.constant 0 : index
    %c0_18 = arith.constant 0 : index
    %19 = vector.load %arg8[%c0_17, %c0_18] : memref<1x64xf32, #tpu.memory_space<vmem>>, vector<1x64xf32>
    %cst_19 = arith.constant dense<0.000000e+00> : vector<1x8xf32>
    %20 = tpu.matmul %19, %18, %cst_19 {dimension_numbers = #tpu.dot_dimension_numbers<[1], [1], [0], [0], [0, 0, 1, 0], [], []>, precision = #tpu.contract_precision<fp32>} : vector<1x64xf32>, vector<8x64xf32>, vector<1x8xf32> -> vector<1x8xf32>
    %c0_20 = arith.constant 0 : index
    %c0_21 = arith.constant 0 : index
    %21 = vector.load %arg9[%c0_20, %c0_21] : memref<1x1xf32, #tpu.memory_space<vmem>>, vector<1x1xf32>
    %22 = vector.broadcast %21 : vector<1x1xf32> to vector<1x8xf32>
    %23 = arith.addf %20, %22 : vector<1x8xf32>
    %24 = vector.shape_cast %23 : vector<1x8xf32> to vector<1x1x8xf32>
    %c0_22 = arith.constant 0 : index
    %c0_23 = arith.constant 0 : index
    %c0_24 = arith.constant 0 : index
    %25 = vector.load %arg10[%c0_22, %c0_23, %c0_24] : memref<1x1x8xf32, #tpu.memory_space<vmem>>, vector<1x1x8xf32>
    tpu.vector_store %arg10[%c0_22, %c0_23, %c0_24], %24 {strides = array<i32>} : memref<1x1x8xf32, #tpu.memory_space<vmem>>, vector<1x1x8xf32>,
    return
  }
  func.func @transform_0(%arg0: i32) -> (i32, i32) {
    %c0_i32 = arith.constant 0 : i32
    %c0_i32_0 = arith.constant 0 : i32
    return %arg0, %c0_i32 : i32, i32
  }
  func.func @transform_1(%arg0: i32) -> (i32, i32) {
    %c0_i32 = arith.constant 0 : i32
    %c0_i32_0 = arith.constant 0 : i32
    return %arg0, %c0_i32 : i32, i32
  }
  func.func @transform_2(%arg0: i32) -> (i32, i32) {
    %c0_i32 = arith.constant 0 : i32
    %c0_i32_0 = arith.constant 0 : i32
    %c0_i32_1 = arith.constant 0 : i32
    return %c0_i32, %c0_i32_0 : i32, i32
  }
  func.func @transform_3(%arg0: i32) -> (i32, i32) {
    %c0_i32 = arith.constant 0 : i32
    %c0_i32_0 = arith.constant 0 : i32
    %c0_i32_1 = arith.constant 0 : i32
    return %c0_i32, %c0_i32_0 : i32, i32
  }
  func.func @transform_4(%arg0: i32) -> (i32, i32) {
    %c0_i32 = arith.constant 0 : i32
    %c0_i32_0 = arith.constant 0 : i32
    %c0_i32_1 = arith.constant 0 : i32
    return %c0_i32, %c0_i32_0 : i32, i32
  }
  func.func @transform_5(%arg0: i32) -> (i32, i32) {
    %c0_i32 = arith.constant 0 : i32
    %c0_i32_0 = arith.constant 0 : i32
    %c0_i32_1 = arith.constant 0 : i32
    return %c0_i32, %c0_i32_0 : i32, i32
  }
  func.func @transform_6(%arg0: i32) -> (i32, i32) {
    %c0_i32 = arith.constant 0 : i32
    %c0_i32_0 = arith.constant 0 : i32
    %c0_i32_1 = arith.constant 0 : i32
    return %c0_i32, %c0_i32_0 : i32, i32
  }
  func.func @transform_7(%arg0: i32) -> (i32, i32) {
    %c0_i32 = arith.constant 0 : i32
    %c0_i32_0 = arith.constant 0 : i32
    %c0_i32_1 = arith.constant 0 : i32
    return %c0_i32, %c0_i32_0 : i32, i32
  }
  func.func @transform_8(%arg0: i32) -> (i32, i32) {
    %c0_i32 = arith.constant 0 : i32
    %c0_i32_0 = arith.constant 0 : i32
    %c0_i32_1 = arith.constant 0 : i32
    return %c0_i32, %c0_i32_0 : i32, i32
  }
  func.func @transform_9(%arg0: i32) -> (i32, i32, i32) {
    %c0_i32 = arith.constant 0 : i32
    %c0_i32_0 = arith.constant 0 : i32
    %c0_i32_1 = arith.constant 0 : i32
    return %arg0, %c0_i32, %c0_i32_0 : i32, i32, i32
  }
}

</mosaic_0001>

<llo_original>
// kernel: regressor_forward.1
$region0: #{regressor_forward.1}
  #allocation0 [shape = 'u32[]', space=smem, size = 0x4, offset = 0x4, fixed_abs, tag = 'smem constant byte address 0x4 - core index']
  #allocation1 [shape = 'u32[144,128]{1,0:T(1,128)}', space=vmem, size = 0x12000, scoped, tag = 'internal scratch']
  #allocation2 [shape = 'f32[1,1]{1,0:T(1,128)S(1)}', space=vmem, size = 0x200, scoped, tag = 'scoped memory for regressor_forward.1']
  %s0 = inlined_call_operand.vmem [shape: f32[8,8], index: 0, kind: input, shape index: {}]
  %s1 = inlined_call_operand.vmem [shape: f32[8,4], index: 1, kind: input, shape index: {}]
  %s2 = inlined_call_operand.vmem [shape: f32[8,64], index: 2, kind: input, shape index: {}]
  %s3 = inlined_call_operand.vmem [shape: f32[4,64], index: 3, kind: input, shape index: {}]
  %s4 = inlined_call_operand.vmem [shape: f32[1,64], index: 4, kind: input, shape index: {}]
  %s5 = inlined_call_operand.hbm [shape: f32[64,64], index: 5, kind: input, shape index: {}]
  %s6 = inlined_call_operand.vmem [shape: f32[1,64], index: 6, kind: input, shape index: {}]
  %s7 = inlined_call_operand.vmem [shape: f32[1,64], index: 7, kind: input, shape index: {}]
  %s8 = inlined_call_operand.<no memory space> [shape: f32[1,1], index: 8, kind: input, shape index: {}]
  %s9 = inlined_call_operand.hbm [shape: f32[1,1,8], index: 9, kind: output, shape index: {}]
  %s10 = sld [smem:[#allocation0]]
  $region50: #{regressor_forward.1} parent=0
    _
  %s12 = ssub.s32 1, %s10
  %s13 = scalar_select 0, %s12, %s10
  %v14 = vstv %s8
  %15 = vst [vmem:[#allocation2] sm:$0x1] %v14
  $region1: #{regressor_forward.1} parent=0
    #allocation3 [shape = 'u8[32768]{0}', space=vmem, size = 0x8000, scoped, tag = 'input window, operand 5, single buffered']
    #allocation4 [shape = 's32[1]{0}', space=sflag, size = 0x4, scoped, tag = 'scoped memory for regressor_forward.1']
    #allocation5 [shape = 's32[1]{0}', space=sflag, size = 0x4, scoped, tag = 'scoped memory for regressor_forward.1']
    #allocation6 [shape = 'u8[512]{0}', space=vmem, size = 0x400, scoped, tag = 'output window, operand 0, single buffered']
    %16 = vsyncpa [#allocation4], 0
    %17 = vsyncpa [#allocation5], 0
    // Predicated region
    $region2: #{regressor_forward.1} parent=1 // pred_check
      _
    $region3: #{regressor_forward.1} parent=1 // pred_check_branch
      %19 = sbr.rel (0) target = $region5
    $region4: #{regressor_forward.1} parent=1 // pred_region
      _
    $region5: #{regressor_forward.1} parent=1 // pred_fallthru
      _
    // Predicated region
    $region6: #{regressor_forward.1} parent=1 // pred_check
      _
    $region7: #{regressor_forward.1} parent=1 // pred_check_branch
      %21 = sbr.rel (0) target = $region9
    $region8: #{regressor_forward.1} parent=1 // pred_region
      _
    $region9: #{regressor_forward.1} parent=1 // pred_fallthru
      _
    // Predicated region
    $region10: #{regressor_forward.1} parent=1 // pred_check
      _
    $region11: #{regressor_forward.1} parent=1 // pred_check_branch
      %23 = sbr.rel (0) target = $region13
    $region12: #{regressor_forward.1} parent=1 // pred_region
      _
    $region13: #{regressor_forward.1} parent=1 // pred_fallthru
      _
    // Predicated region
    $region14: #{regressor_forward.1} parent=1 // pred_check
      _
    $region15: #{regressor_forward.1} parent=1 // pred_check_branch
      %25 = sbr.rel (0) target = $region17
    $region16: #{regressor_forward.1} parent=1 // pred_region
      _
    $region17: #{regressor_forward.1} parent=1 // pred_fallthru
      _
    // Predicated region
    $region18: #{regressor_forward.1} parent=1 // pred_check
      _
    $region19: #{regressor_forward.1} parent=1 // pred_check_branch
      %27 = sbr.rel (0) target = $region21
    $region20: #{regressor_forward.1} parent=1 // pred_region
      _
    $region21: #{regressor_forward.1} parent=1 // pred_fallthru
      _
    // Predicated region
    $region22: #{regressor_forward.1} parent=1 // pred_check
      _
    $region23: #{regressor_forward.1} parent=1 // pred_check_branch
      %29 = sbr.rel (0) target = $region25
    $region24: #{regressor_forward.1} parent=1 // pred_region
      %s31 = ssub.s32 1024, 1024
      %32 = vsyncadd [#allocation4], %s31
      %s33 = sshll.u32 [#allocation3], 4
      %s34 = int_to_ptr.vmem [resolvable:$true] %s33
      %39 = dma.hbm_to_vmem [thread:$0]  %s5, 1024, %s34, [#allocation4], 128, 128, 8
    $region25: #{regressor_forward.1} parent=1 // pred_fallthru
      _
    // Predicated region
    $region26: #{regressor_forward.1} parent=1 // pred_check
      _
    $region27: #{regressor_forward.1} parent=1 // pred_check_branch
      %41 = sbr.rel (0) target = $region29
    $region28: #{regressor_forward.1} parent=1 // pred_region
      _
    $region29: #{regressor_forward.1} parent=1 // pred_fallthru
      _
    // Predicated region
    $region30: #{regressor_forward.1} parent=1 // pred_check
      _
    $region31: #{regressor_forward.1} parent=1 // pred_check_branch
      %43 = sbr.rel (0) target = $region33
    $region32: #{regressor_forward.1} parent=1 // pred_region
      _
    $region33: #{regressor_forward.1} parent=1 // pred_fallthru
      _
    // Predicated region
    $region34: #{regressor_forward.1} parent=1 // pred_check
      _
    $region35: #{regressor_forward.1} parent=1 // pred_check_branch
      %45 = sbr.rel (0) target = $region37
    $region36: #{regressor_forward.1} parent=1 // pred_region
      _
    $region37: #{regressor_forward.1} parent=1 // pred_fallthru
      _
    // Predicated region
    $region38: #{regressor_forward.1} parent=1 // pred_check
      _
    $region39: #{regressor_forward.1} parent=1 // pred_check_branch
      %47 = sbr.rel (0) target = $region41
    $region40: #{regressor_forward.1} parent=1 // pred_region
      %48 = dma.done [#allocation4], 1024
    $region41: #{regressor_forward.1} parent=1 // pred_fallthru
      _
    %v49 = vld [vmem:[%s0] sm:$0xff]
    %v50 = vld [vmem:[%s2] sm:$0xff]
    %v51 = vld [vmem:[%s1] sm:$0xff]
    %v52 = vld [vmem:[%s3] sm:$0xf]
    %vm53 = vcmask 31744
    %v55 = vsel %vm53, %v51, 0
    %vm57 = vcmask 1043456
    %v59 = vsel %vm57, %v52, 0
    %61 = vmatprep.subr.mxu0 0.0
    %v62 = vand.u32 %v59, 4294901760
    %63 = vmatpush1.msra.mxu0 %v62
    %64 = vmatprep.subr.mxu0 0.0
    %65 = vmatpush1.msra.mxu0 0.0
    %66 = vmatprep.subr.mxu0 0.0
    %67 = vmatpush1.msra.mxu0 0.0
    %68 = vmatprep.subr.mxu0 0.0
    %69 = vmatpush1.msra.mxu0 0.0
    %70 = vmatprep.subr.mxu0 0.0
    %71 = vmatpush1.msra.mxu0 0.0
    %72 = vmatprep.subr.mxu0 0.0
    %73 = vmatpush1.msra.mxu0 0.0
    %74 = vmatprep.subr.mxu0 0.0
    %75 = vmatpush1.msra.mxu0 0.0
    %76 = vmatprep.subr.mxu0 0.0
    %77 = vmatpush1.msra.mxu0 0.0
    %78 = vmatprep.subr.mxu0 0.0
    %79 = vmatpush1.msra.mxu0 0.0
    %80 = vmatprep.subr.mxu0 0.0
    %81 = vmatpush1.msra.mxu0 0.0
    %82 = vmatprep.subr.mxu0 0.0
    %83 = vmatpush1.msra.mxu0 0.0
    %84 = vmatprep.subr.mxu0 0.0
    %85 = vmatpush1.msra.mxu0 0.0
    %86 = vmatprep.subr.mxu0 0.0
    %87 = vmatpush1.msra.mxu0 0.0
    %88 = vmatprep.subr.mxu0 0.0
    %89 = vmatpush1.msra.mxu0 0.0
    %90 = vmatprep.subr.mxu0 0.0
    %91 = vmatpush1.msra.mxu0 0.0
    %92 = vmatprep.subr.mxu0 0.0
    %93 = vmatpush1.msra.mxu0 0.0
    %94 = vmatprep.subr.mxu0 0.0
    %95 = vmatpush1.msra.mxu0 0.0
    %96 = vmatprep.subr.mxu0 0.0
    %97 = vmatpush1.msra.mxu0 0.0
    %98 = vmatprep.subr.mxu0 0.0
    %99 = vmatpush1.msra.mxu0 0.0
    %100 = vmatprep.subr.mxu0 0.0
    %101 = vmatpush1.msra.mxu0 0.0
    %102 = vmatprep.subr.mxu0 0.0
    %103 = vmatpush1.msra.mxu0 0.0
    %104 = vmatprep.subr.mxu0 0.0
    %105 = vmatpush1.msra.mxu0 0.0
    %106 = vmatprep.subr.mxu0 0.0
    %107 = vmatpush1.msra.mxu0 0.0
    %108 = vmatprep.subr.mxu0 0.0
    %109 = vmatpush1.msra.mxu0 0.0
    %110 = vmatprep.subr.mxu0 0.0
    %111 = vmatpush1.msra.mxu0 0.0
    %112 = vmatprep.subr.mxu0 0.0
    %113 = vmatpush1.msra.mxu0 0.0
    %114 = vmatprep.subr.mxu0 0.0
    %115 = vmatpush1.msra.mxu0 0.0
    %116 = vmatprep.subr.mxu0 0.0
    %117 = vmatpush1.msra.mxu0 0.0
    %118 = vmatprep.subr.mxu0 0.0
    %119 = vmatpush1.msra.mxu0 0.0
    %120 = vmatprep.subr.mxu0 0.0
    %121 = vmatpush1.msra.mxu0 0.0
    %122 = vmatprep.subr.mxu0 0.0
    %123 = vmatpush1.msra.mxu0 0.0
    %124 = vmatprep.subr.mxu0 0.0
    %125 = vmatpush1.msra.mxu0 0.0
    %126 = vmatprep.mubr.f32.mxu0 0.0
    %v127 = vand.u32 %v55, 4294901760
    %v128 = vsub.f32 %v55, %v127
    %v129 = vand.u32 %v128, 4294901760
    %v130 = vsub.f32 %v128, %v129
    %v131 = vand.u32 %v130, 4294901760
    %132 = vmatmul.mubr.f32.gmra.mrb[0].mxu0 %v131
    %v133 = vpop.f32.mrb[0].mxu0
    %v134 = vadd.f32 0.0, %v133
    %v135 = vpop.f32.mrb[0].mxu0
    %136 = vdwg.mxu0
    %137 = vmatprep.subr.mxu0 0.0
    %v138 = vand.u32 %v59, 4294901760
    %v139 = vsub.f32 %v59, %v138
    %v140 = vand.u32 %v139, 4294901760
    %v141 = vsub.f32 %v139, %v140
    %v142 = vand.u32 %v141, 4294901760
    %143 = vmatpush1.msra.mxu0 %v142
    %144 = vmatprep.subr.mxu0 0.0
    %145 = vmatpush1.msra.mxu0 0.0
    %146 = vmatprep.subr.mxu0 0.0
    %147 = vmatpush1.msra.mxu0 0.0
    %148 = vmatprep.subr.mxu0 0.0
    %149 = vmatpush1.msra.mxu0 0.0
    %150 = vmatprep.subr.mxu0 0.0
    %151 = vmatpush1.msra.mxu0 0.0
    %152 = vmatprep.subr.mxu0 0.0
    %153 = vmatpush1.msra.mxu0 0.0
    %154 = vmatprep.subr.mxu0 0.0
    %155 = vmatpush1.msra.mxu0 0.0
    %156 = vmatprep.subr.mxu0 0.0
    %157 = vmatpush1.msra.mxu0 0.0
    %158 = vmatprep.subr.mxu0 0.0
    %159 = vmatpush1.msra.mxu0 0.0
    %160 = vmatprep.subr.mxu0 0.0
    %161 = vmatpush1.msra.mxu0 0.0
    %162 = vmatprep.subr.mxu0 0.0
    %163 = vmatpush1.msra.mxu0 0.0
    %164 = vmatprep.subr.mxu0 0.0
    %165 = vmatpush1.msra.mxu0 0.0
    %166 = vmatprep.subr.mxu0 0.0
    %167 = vmatpush1.msra.mxu0 0.0
    %168 = vmatprep.subr.mxu0 0.0
    %169 = vmatpush1.msra.mxu0 0.0
    %170 = vmatprep.subr.mxu0 0.0
    %171 = vmatpush1.msra.mxu0 0.0
    %172 = vmatprep.subr.mxu0 0.0
    %173 = vmatpush1.msra.mxu0 0.0
    %174 = vmatprep.subr.mxu0 0.0
    %175 = vmatpush1.msra.mxu0 0.0
    %176 = vmatprep.subr.mxu0 0.0
    %177 = vmatpush1.msra.mxu0 0.0
    %178 = vmatprep.subr.mxu0 0.0
    %179 = vmatpush1.msra.mxu0 0.0
    %180 = vmatprep.subr.mxu0 0.0
    %181 = vmatpush1.msra.mxu0 0.0
    %182 = vmatprep.subr.mxu0 0.0
    %183 = vmatpush1.msra.mxu0 0.0
    %184 = vmatprep.subr.mxu0 0.0
    %185 = vmatpush1.msra.mxu0 0.0
    %186 = vmatprep.subr.mxu0 0.0
    %187 = vmatpush1.msra.mxu0 0.0
    %188 = vmatprep.subr.mxu0 0.0
    %189 = vmatpush1.msra.mxu0 0.0
    %190 = vmatprep.subr.mxu0 0.0
    %191 = vmatpush1.msra.mxu0 0.0
    %192 = vmatprep.subr.mxu0 0.0
    %193 = vmatpush1.msra.mxu0 0.0
    %194 = vmatprep.subr.mxu0 0.0
    %195 = vmatpush1.msra.mxu0 0.0
    %196 = vmatprep.subr.mxu0 0.0
    %197 = vmatpush1.msra.mxu0 0.0
    %198 = vmatprep.subr.mxu0 0.0
    %199 = vmatpush1.msra.mxu0 0.0
    %200 = vmatprep.subr.mxu0 0.0
    %201 = vmatpush1.msra.mxu0 0.0
    %202 = vmatprep.subr.mxu0 0.0
    %203 = vmatpush1.msra.mxu0 0.0
    %204 = vmatprep.subr.mxu0 0.0
    %205 = vmatpush1.msra.mxu0 0.0
    %206 = vmatprep.mubr.f32.mxu0 0.0
    %v207 = vand.u32 %v55, 4294901760
    %208 = vmatmul.mubr.f32.gmra.mrb[0].mxu0 %v207
    %v209 = vpop.f32.mrb[0].mxu0
    %v210 = vadd.f32 %v134, %v209
    %v211 = vpop.f32.mrb[0].mxu0
    %212 = vdwg.mxu0
    %213 = vmatprep.subr.mxu0 0.0
    %v214 = vand.u32 %v59, 4294901760
    %v215 = vsub.f32 %v59, %v214
    %216 = vmatpush1.msra.mxu0 %v215
    %217 = vmatprep.subr.mxu0 0.0
    %218 = vmatpush1.msra.mxu0 0.0
    %219 = vmatprep.subr.mxu0 0.0
    %220 = vmatpush1.msra.mxu0 0.0
    %221 = vmatprep.subr.mxu0 0.0
    %222 = vmatpush1.msra.mxu0 0.0
    %223 = vmatprep.subr.mxu0 0.0
    %224 = vmatpush1.msra.mxu0 0.0
    %225 = vmatprep.subr.mxu0 0.0
    %226 = vmatpush1.msra.mxu0 0.0
    %227 = vmatprep.subr.mxu0 0.0
    %228 = vmatpush1.msra.mxu0 0.0
    %229 = vmatprep.subr.mxu0 0.0
    %230 = vmatpush1.msra.mxu0 0.0
    %231 = vmatprep.subr.mxu0 0.0
    %232 = vmatpush1.msra.mxu0 0.0
    %233 = vmatprep.subr.mxu0 0.0
    %234 = vmatpush1.msra.mxu0 0.0
    %235 = vmatprep.subr.mxu0 0.0
    %236 = vmatpush1.msra.mxu0 0.0
    %237 = vmatprep.subr.mxu0 0.0
    %238 = vmatpush1.msra.mxu0 0.0
    %239 = vmatprep.subr.mxu0 0.0
    %240 = vmatpush1.msra.mxu0 0.0
    %241 = vmatprep.subr.mxu0 0.0
    %242 = vmatpush1.msra.mxu0 0.0
    %243 = vmatprep.subr.mxu0 0.0
    %244 = vmatpush1.msra.mxu0 0.0
    %245 = vmatprep.subr.mxu0 0.0
    %246 = vmatpush1.msra.mxu0 0.0
    %247 = vmatprep.subr.mxu0 0.0
    %248 = vmatpush1.msra.mxu0 0.0
    %249 = vmatprep.subr.mxu0 0.0
    %250 = vmatpush1.msra.mxu0 0.0
    %251 = vmatprep.subr.mxu0 0.0
    %252 = vmatpush1.msra.mxu0 0.0
    %253 = vmatprep.subr.mxu0 0.0
    %254 = vmatpush1.msra.mxu0 0.0
    %255 = vmatprep.subr.mxu0 0.0
    %256 = vmatpush1.msra.mxu0 0.0
    %257 = vmatprep.subr.mxu0 0.0
    %258 = vmatpush1.msra.mxu0 0.0
    %259 = vmatprep.subr.mxu0 0.0
    %260 = vmatpush1.msra.mxu0 0.0
    %261 = vmatprep.subr.mxu0 0.0
    %262 = vmatpush1.msra.mxu0 0.0
    %263 = vmatprep.subr.mxu0 0.0
    %264 = vmatpush1.msra.mxu0 0.0
    %265 = vmatprep.subr.mxu0 0.0
    %266 = vmatpush1.msra.mxu0 0.0
    %267 = vmatprep.subr.mxu0 0.0
    %268 = vmatpush1.msra.mxu0 0.0
    %269 = vmatprep.subr.mxu0 0.0
    %270 = vmatpush1.msra.mxu0 0.0
    %271 = vmatprep.subr.mxu0 0.0
    %272 = vmatpush1.msra.mxu0 0.0
    %273 = vmatprep.subr.mxu0 0.0
    %274 = vmatpush1.msra.mxu0 0.0
    %275 = vmatprep.subr.mxu0 0.0
    %276 = vmatpush1.msra.mxu0 0.0
    %277 = vmatprep.subr.mxu0 0.0
    %278 = vmatpush1.msra.mxu0 0.0
    %279 = vmatprep.mubr.f32.mxu0 0.0
    %v280 = vand.u32 %v55, 4294901760
    %v281 = vsub.f32 %v55, %v280
    %282 = vmatmul.mubr.f32.gmra.mrb[0].mxu0 %v281
    %v283 = vpop.f32.mrb[0].mxu0
    %v284 = vadd.f32 %v210, %v283
    %v285 = vpop.f32.mrb[0].mxu0
    %286 = vdwg.mxu0
    %287 = vmatprep.subr.mxu0 0.0
    %v288 = vand.u32 %v59, 4294901760
    %289 = vmatpush1.msra.mxu0 %v288
    %290 = vmatprep.subr.mxu0 0.0
    %291 = vmatpush1.msra.mxu0 0.0
    %292 = vmatprep.subr.mxu0 0.0
    %293 = vmatpush1.msra.mxu0 0.0
    %294 = vmatprep.subr.mxu0 0.0
    %295 = vmatpush1.msra.mxu0 0.0
    %296 = vmatprep.subr.mxu0 0.0
    %297 = vmatpush1.msra.mxu0 0.0
    %298 = vmatprep.subr.mxu0 0.0
    %299 = vmatpush1.msra.mxu0 0.0
    %300 = vmatprep.subr.mxu0 0.0
    %301 = vmatpush1.msra.mxu0 0.0
    %302 = vmatprep.subr.mxu0 0.0
    %303 = vmatpush1.msra.mxu0 0.0
    %304 = vmatprep.subr.mxu0 0.0
    %305 = vmatpush1.msra.mxu0 0.0
    %306 = vmatprep.subr.mxu0 0.0
    %307 = vmatpush1.msra.mxu0 0.0
    %308 = vmatprep.subr.mxu0 0.0
    %309 = vmatpush1.msra.mxu0 0.0
    %310 = vmatprep.subr.mxu0 0.0
    %311 = vmatpush1.msra.mxu0 0.0
    %312 = vmatprep.subr.mxu0 0.0
    %313 = vmatpush1.msra.mxu0 0.0
    %314 = vmatprep.subr.mxu0 0.0
    %315 = vmatpush1.msra.mxu0 0.0
    %316 = vmatprep.subr.mxu0 0.0
    %317 = vmatpush1.msra.mxu0 0.0
    %318 = vmatprep.subr.mxu0 0.0
    %319 = vmatpush1.msra.mxu0 0.0
    %320 = vmatprep.subr.mxu0 0.0
    %321 = vmatpush1.msra.mxu0 0.0
    %322 = vmatprep.subr.mxu0 0.0
    %323 = vmatpush1.msra.mxu0 0.0
    %324 = vmatprep.subr.mxu0 0.0
    %325 = vmatpush1.msra.mxu0 0.0
    %326 = vmatprep.subr.mxu0 0.0
    %327 = vmatpush1.msra.mxu0 0.0
    %328 = vmatprep.subr.mxu0 0.0
    %329 = vmatpush1.msra.mxu0 0.0
    %330 = vmatprep.subr.mxu0 0.0
    %331 = vmatpush1.msra.mxu0 0.0
    %332 = vmatprep.subr.mxu0 0.0
    %333 = vmatpush1.msra.mxu0 0.0
    %334 = vmatprep.subr.mxu0 0.0
    %335 = vmatpush1.msra.mxu0 0.0
    %336 = vmatprep.subr.mxu0 0.0
    %337 = vmatpush1.msra.mxu0 0.0
    %338 = vmatprep.subr.mxu0 0.0
    %339 = vmatpush1.msra.mxu0 0.0
    %340 = vmatprep.subr.mxu0 0.0
    %341 = vmatpush1.msra.mxu0 0.0
    %342 = vmatprep.subr.mxu0 0.0
    %343 = vmatpush1.msra.mxu0 0.0
    %344 = vmatprep.subr.mxu0 0.0
    %345 = vmatpush1.msra.mxu0 0.0
    %346 = vmatprep.subr.mxu0 0.0
    %347 = vmatpush1.msra.mxu0 0.0
    %348 = vmatprep.subr.mxu0 0.0
    %349 = vmatpush1.msra.mxu0 0.0
    %350 = vmatprep.subr.mxu0 0.0
    %351 = vmatpush1.msra.mxu0 0.0
    %352 = vmatprep.mubr.f32.mxu0 0.0
    %v353 = vand.u32 %v55, 4294901760
    %v354 = vsub.f32 %v55, %v353
    %v355 = vand.u32 %v354, 4294901760
    %356 = vmatmul.mubr.f32.gmra.mrb[0].mxu0 %v355
    %v357 = vpop.f32.mrb[0].mxu0
    %v358 = vadd.f32 %v284, %v357
    %v359 = vpop.f32.mrb[0].mxu0
    %360 = vdwg.mxu0
    %361 = vmatprep.subr.mxu0 0.0
    %v362 = vand.u32 %v59, 4294901760
    %v363 = vsub.f32 %v59, %v362
    %v364 = vand.u32 %v363, 4294901760
    %365 = vmatpush1.msra.mxu0 %v364
    %366 = vmatprep.subr.mxu0 0.0
    %367 = vmatpush1.msra.mxu0 0.0
    %368 = vmatprep.subr.mxu0 0.0
    %369 = vmatpush1.msra.mxu0 0.0
    %370 = vmatprep.subr.mxu0 0.0
    %371 = vmatpush1.msra.mxu0 0.0
    %372 = vmatprep.subr.mxu0 0.0
    %373 = vmatpush1.msra.mxu0 0.0
    %374 = vmatprep.subr.mxu0 0.0
    %375 = vmatpush1.msra.mxu0 0.0
    %376 = vmatprep.subr.mxu0 0.0
    %377 = vmatpush1.msra.mxu0 0.0
    %378 = vmatprep.subr.mxu0 0.0
    %379 = vmatpush1.msra.mxu0 0.0
    %380 = vmatprep.subr.mxu0 0.0
    %381 = vmatpush1.msra.mxu0 0.0
    %382 = vmatprep.subr.mxu0 0.0
    %383 = vmatpush1.msra.mxu0 0.0
    %384 = vmatprep.subr.mxu0 0.0
    %385 = vmatpush1.msra.mxu0 0.0
    %386 = vmatprep.subr.mxu0 0.0
    %387 = vmatpush1.msra.mxu0 0.0
    %388 = vmatprep.subr.mxu0 0.0
    %389 = vmatpush1.msra.mxu0 0.0
    %390 = vmatprep.subr.mxu0 0.0
    %391 = vmatpush1.msra.mxu0 0.0
    %392 = vmatprep.subr.mxu0 0.0
    %393 = vmatpush1.msra.mxu0 0.0
    %394 = vmatprep.subr.mxu0 0.0
    %395 = vmatpush1.msra.mxu0 0.0
    %396 = vmatprep.subr.mxu0 0.0
    %397 = vmatpush1.msra.mxu0 0.0
    %398 = vmatprep.subr.mxu0 0.0
    %399 = vmatpush1.msra.mxu0 0.0
    %400 = vmatprep.subr.mxu0 0.0
    %401 = vmatpush1.msra.mxu0 0.0
    %402 = vmatprep.subr.mxu0 0.0
    %403 = vmatpush1.msra.mxu0 0.0
    %404 = vmatprep.subr.mxu0 0.0
    %405 = vmatpush1.msra.mxu0 0.0
    %406 = vmatprep.subr.mxu0 0.0
    %407 = vmatpush1.msra.mxu0 0.0
    %408 = vmatprep.subr.mxu0 0.0
    %409 = vmatpush1.msra.mxu0 0.0
    %410 = vmatprep.subr.mxu0 0.0
    %411 = vmatpush1.msra.mxu0 0.0
    %412 = vmatprep.subr.mxu0 0.0
    %413 = vmatpush1.msra.mxu0 0.0
    %414 = vmatprep.subr.mxu0 0.0
    %415 = vmatpush1.msra.mxu0 0.0
    %416 = vmatprep.subr.mxu0 0.0
    %417 = vmatpush1.msra.mxu0 0.0
    %418 = vmatprep.subr.mxu0 0.0
    %419 = vmatpush1.msra.mxu0 0.0
    %420 = vmatprep.subr.mxu0 0.0
    %421 = vmatpush1.msra.mxu0 0.0
    %422 = vmatprep.subr.mxu0 0.0
    %423 = vmatpush1.msra.mxu0 0.0
    %424 = vmatprep.subr.mxu0 0.0
    %425 = vmatpush1.msra.mxu0 0.0
    %426 = vmatprep.subr.mxu0 0.0
    %427 = vmatpush1.msra.mxu0 0.0
    %428 = vmatprep.mubr.f32.mxu0 0.0
    %v429 = vand.u32 %v55, 4294901760
    %430 = vmatmul.mubr.f32.gmra.mrb[0].mxu0 %v429
    %v431 = vpop.f32.mrb[0].mxu0
    %v432 = vadd.f32 %v358, %v431
    %v433 = vpop.f32.mrb[0].mxu0
    %434 = vdwg.mxu0
    %435 = vmatprep.subr.mxu0 0.0
    %v436 = vand.u32 %v59, 4294901760
    %437 = vmatpush1.msra.mxu0 %v436
    %438 = vmatprep.subr.mxu0 0.0
    %439 = vmatpush1.msra.mxu0 0.0
    %440 = vmatprep.subr.mxu0 0.0
    %441 = vmatpush1.msra.mxu0 0.0
    %442 = vmatprep.subr.mxu0 0.0
    %443 = vmatpush1.msra.mxu0 0.0
    %444 = vmatprep.subr.mxu0 0.0
    %445 = vmatpush1.msra.mxu0 0.0
    %446 = vmatprep.subr.mxu0 0.0
    %447 = vmatpush1.msra.mxu0 0.0
    %448 = vmatprep.subr.mxu0 0.0
    %449 = vmatpush1.msra.mxu0 0.0
    %450 = vmatprep.subr.mxu0 0.0
    %451 = vmatpush1.msra.mxu0 0.0
    %452 = vmatprep.subr.mxu0 0.0
    %453 = vmatpush1.msra.mxu0 0.0
    %454 = vmatprep.subr.mxu0 0.0
    %455 = vmatpush1.msra.mxu0 0.0
    %456 = vmatprep.subr.mxu0 0.0
    %457 = vmatpush1.msra.mxu0 0.0
    %458 = vmatprep.subr.mxu0 0.0
    %459 = vmatpush1.msra.mxu0 0.0
    %460 = vmatprep.subr.mxu0 0.0
    %461 = vmatpush1.msra.mxu0 0.0
    %462 = vmatprep.subr.mxu0 0.0
    %463 = vmatpush1.msra.mxu0 0.0
    %464 = vmatprep.subr.mxu0 0.0
    %465 = vmatpush1.msra.mxu0 0.0
    %466 = vmatprep.subr.mxu0 0.0
    %467 = vmatpush1.msra.mxu0 0.0
    %468 = vmatprep.subr.mxu0 0.0
    %469 = vmatpush1.msra.mxu0 0.0
    %470 = vmatprep.subr.mxu0 0.0
    %471 = vmatpush1.msra.mxu0 0.0
    %472 = vmatprep.subr.mxu0 0.0
    %473 = vmatpush1.msra.mxu0 0.0
    %474 = vmatprep.subr.mxu0 0.0
    %475 = vmatpush1.msra.mxu0 0.0
    %476 = vmatprep.subr.mxu0 0.0
    %477 = vmatpush1.msra.mxu0 0.0
    %478 = vmatprep.subr.mxu0 0.0
    %479 = vmatpush1.msra.mxu0 0.0
    %480 = vmatprep.subr.mxu0 0.0
    %481 = vmatpush1.msra.mxu0 0.0
    %482 = vmatprep.subr.mxu0 0.0
    %483 = vmatpush1.msra.mxu0 0.0
    %484 = vmatprep.subr.mxu0 0.0
    %485 = vmatpush1.msra.mxu0 0.0
    %486 = vmatprep.subr.mxu0 0.0
    %487 = vmatpush1.msra.mxu0 0.0
    %488 = vmatprep.subr.mxu0 0.0
    %489 = vmatpush1.msra.mxu0 0.0
    %490 = vmatprep.subr.mxu0 0.0
    %491 = vmatpush1.msra.mxu0 0.0
    %492 = vmatprep.subr.mxu0 0.0
    %493 = vmatpush1.msra.mxu0 0.0
    %494 = vmatprep.subr.mxu0 0.0
    %495 = vmatpush1.msra.mxu0 0.0
    %496 = vmatprep.subr.mxu0 0.0
    %497 = vmatpush1.msra.mxu0 0.0
    %498 = vmatprep.subr.mxu0 0.0
    %499 = vmatpush1.msra.mxu0 0.0
    %500 = vmatprep.mubr.f32.mxu0 0.0
    %v501 = vand.u32 %v55, 4294901760
    %502 = vmatmul.mubr.f32.gmra.mrb[0].mxu0 %v501
    %v503 = vpop.f32.mrb[0].mxu0
    %v504 = vadd.f32 %v432, %v503
    %v505 = vpop.f32.mrb[0].mxu0
    %506 = vdwg.mxu0
    %vm507 = vcmask 64512
    %v509 = vsel %vm507, %v49, 0
    %511 = vmatprep.subr.mxu0 0.0
    %v512 = vand.u32 %v50, 4294901760
    %513 = vmatpush1.msra.mxu0 %v512
    %514 = vmatprep.subr.mxu0 0.0
    %515 = vmatpush1.msra.mxu0 0.0
    %516 = vmatprep.subr.mxu0 0.0
    %517 = vmatpush1.msra.mxu0 0.0
    %518 = vmatprep.subr.mxu0 0.0
    %519 = vmatpush1.msra.mxu0 0.0
    %520 = vmatprep.subr.mxu0 0.0
    %521 = vmatpush1.msra.mxu0 0.0
    %522 = vmatprep.subr.mxu0 0.0
    %523 = vmatpush1.msra.mxu0 0.0
    %524 = vmatprep.subr.mxu0 0.0
    %525 = vmatpush1.msra.mxu0 0.0
    %526 = vmatprep.subr.mxu0 0.0
    %527 = vmatpush1.msra.mxu0 0.0
    %528 = vmatprep.subr.mxu0 0.0
    %529 = vmatpush1.msra.mxu0 0.0
    %530 = vmatprep.subr.mxu0 0.0
    %531 = vmatpush1.msra.mxu0 0.0
    %532 = vmatprep.subr.mxu0 0.0
    %533 = vmatpush1.msra.mxu0 0.0
    %534 = vmatprep.subr.mxu0 0.0
    %535 = vmatpush1.msra.mxu0 0.0
    %536 = vmatprep.subr.mxu0 0.0
    %537 = vmatpush1.msra.mxu0 0.0
    %538 = vmatprep.subr.mxu0 0.0
    %539 = vmatpush1.msra.mxu0 0.0
    %540 = vmatprep.subr.mxu0 0.0
    %541 = vmatpush1.msra.mxu0 0.0
    %542 = vmatprep.subr.mxu0 0.0
    %543 = vmatpush1.msra.mxu0 0.0
    %544 = vmatprep.subr.mxu0 0.0
    %545 = vmatpush1.msra.mxu0 0.0
    %546 = vmatprep.subr.mxu0 0.0
    %547 = vmatpush1.msra.mxu0 0.0
    %548 = vmatprep.subr.mxu0 0.0
    %549 = vmatpush1.msra.mxu0 0.0
    %550 = vmatprep.subr.mxu0 0.0
    %551 = vmatpush1.msra.mxu0 0.0
    %552 = vmatprep.subr.mxu0 0.0
    %553 = vmatpush1.msra.mxu0 0.0
    %554 = vmatprep.subr.mxu0 0.0
    %555 = vmatpush1.msra.mxu0 0.0
    %556 = vmatprep.subr.mxu0 0.0
    %557 = vmatpush1.msra.mxu0 0.0
    %558 = vmatprep.subr.mxu0 0.0
    %559 = vmatpush1.msra.mxu0 0.0
    %560 = vmatprep.subr.mxu0 0.0
    %561 = vmatpush1.msra.mxu0 0.0
    %562 = vmatprep.subr.mxu0 0.0
    %563 = vmatpush1.msra.mxu0 0.0
    %564 = vmatprep.subr.mxu0 0.0
    %565 = vmatpush1.msra.mxu0 0.0
    %566 = vmatprep.subr.mxu0 0.0
    %567 = vmatpush1.msra.mxu0 0.0
    %568 = vmatprep.subr.mxu0 0.0
    %569 = vmatpush1.msra.mxu0 0.0
    %570 = vmatprep.subr.mxu0 0.0
    %571 = vmatpush1.msra.mxu0 0.0
    %572 = vmatprep.subr.mxu0 0.0
    %573 = vmatpush1.msra.mxu0 0.0
    %574 = vmatprep.subr.mxu0 0.0
    %575 = vmatpush1.msra.mxu0 0.0
    %576 = vmatprep.mubr.f32.mxu0 0.0
    %v577 = vand.u32 %v509, 4294901760
    %v578 = vsub.f32 %v509, %v577
    %v579 = vand.u32 %v578, 4294901760
    %v580 = vsub.f32 %v578, %v579
    %v581 = vand.u32 %v580, 4294901760
    %582 = vmatmul.mubr.f32.gmra.mrb[0].mxu0 %v581
    %v583 = vpop.f32.mrb[0].mxu0
    %v584 = vadd.f32 %v504, %v583
    %v585 = vpop.f32.mrb[0].mxu0
    %586 = vdwg.mxu0
    %587 = vmatprep.subr.mxu0 0.0
    %v588 = vand.u32 %v50, 4294901760
    %v589 = vsub.f32 %v50, %v588
    %v590 = vand.u32 %v589, 4294901760
    %v591 = vsub.f32 %v589, %v590
    %v592 = vand.u32 %v591, 4294901760
    %593 = vmatpush1.msra.mxu0 %v592
    %594 = vmatprep.subr.mxu0 0.0
    %595 = vmatpush1.msra.mxu0 0.0
    %596 = vmatprep.subr.mxu0 0.0
    %597 = vmatpush1.msra.mxu0 0.0
    %598 = vmatprep.subr.mxu0 0.0
    %599 = vmatpush1.msra.mxu0 0.0
    %600 = vmatprep.subr.mxu0 0.0
    %601 = vmatpush1.msra.mxu0 0.0
    %602 = vmatprep.subr.mxu0 0.0
    %603 = vmatpush1.msra.mxu0 0.0
    %604 = vmatprep.subr.mxu0 0.0
    %605 = vmatpush1.msra.mxu0 0.0
    %606 = vmatprep.subr.mxu0 0.0
    %607 = vmatpush1.msra.mxu0 0.0
    %608 = vmatprep.subr.mxu0 0.0
    %609 = vmatpush1.msra.mxu0 0.0
    %610 = vmatprep.subr.mxu0 0.0
    %611 = vmatpush1.msra.mxu0 0.0
    %612 = vmatprep.subr.mxu0 0.0
    %613 = vmatpush1.msra.mxu0 0.0
    %614 = vmatprep.subr.mxu0 0.0
    %615 = vmatpush1.msra.mxu0 0.0
    %616 = vmatprep.subr.mxu0 0.0
    %617 = vmatpush1.msra.mxu0 0.0
    %618 = vmatprep.subr.mxu0 0.0
    %619 = vmatpush1.msra.mxu0 0.0
    %620 = vmatprep.subr.mxu0 0.0
    %621 = vmatpush1.msra.mxu0 0.0
    %622 = vmatprep.subr.mxu0 0.0
    %623 = vmatpush1.msra.mxu0 0.0
    %624 = vmatprep.subr.mxu0 0.0
    %625 = vmatpush1.msra.mxu0 0.0
    %626 = vmatprep.subr.mxu0 0.0
    %627 = vmatpush1.msra.mxu0 0.0
    %628 = vmatprep.subr.mxu0 0.0
    %629 = vmatpush1.msra.mxu0 0.0
    %630 = vmatprep.subr.mxu0 0.0
    %631 = vmatpush1.msra.mxu0 0.0
    %632 = vmatprep.subr.mxu0 0.0
    %633 = vmatpush1.msra.mxu0 0.0
    %634 = vmatprep.subr.mxu0 0.0
    %635 = vmatpush1.msra.mxu0 0.0
    %636 = vmatprep.subr.mxu0 0.0
    %637 = vmatpush1.msra.mxu0 0.0
    %638 = vmatprep.subr.mxu0 0.0
    %639 = vmatpush1.msra.mxu0 0.0
    %640 = vmatprep.subr.mxu0 0.0
    %641 = vmatpush1.msra.mxu0 0.0
    %642 = vmatprep.subr.mxu0 0.0
    %643 = vmatpush1.msra.mxu0 0.0
    %644 = vmatprep.subr.mxu0 0.0
    %645 = vmatpush1.msra.mxu0 0.0
    %646 = vmatprep.subr.mxu0 0.0
    %647 = vmatpush1.msra.mxu0 0.0
    %648 = vmatprep.subr.mxu0 0.0
    %649 = vmatpush1.msra.mxu0 0.0
    %650 = vmatprep.subr.mxu0 0.0
    %651 = vmatpush1.msra.mxu0 0.0
    %652 = vmatprep.subr.mxu0 0.0
    %653 = vmatpush1.msra.mxu0 0.0
    %654 = vmatprep.subr.mxu0 0.0
    %655 = vmatpush1.msra.mxu0 0.0
    %656 = vmatprep.mubr.f32.mxu0 0.0
    %v657 = vand.u32 %v509, 4294901760
    %658 = vmatmul.mubr.f32.gmra.mrb[0].mxu0 %v657
    %v659 = vpop.f32.mrb[0].mxu0
    %v660 = vadd.f32 %v584, %v659
    %v661 = vpop.f32.mrb[0].mxu0
    %662 = vdwg.mxu0
    %663 = vmatprep.subr.mxu0 0.0
    %v664 = vand.u32 %v50, 4294901760
    %v665 = vsub.f32 %v50, %v664
    %666 = vmatpush1.msra.mxu0 %v665
    %667 = vmatprep.subr.mxu0 0.0
    %668 = vmatpush1.msra.mxu0 0.0
    %669 = vmatprep.subr.mxu0 0.0
    %670 = vmatpush1.msra.mxu0 0.0
    %671 = vmatprep.subr.mxu0 0.0
    %672 = vmatpush1.msra.mxu0 0.0
    %673 = vmatprep.subr.mxu0 0.0
    %674 = vmatpush1.msra.mxu0 0.0
    %675 = vmatprep.subr.mxu0 0.0
    %676 = vmatpush1.msra.mxu0 0.0
    %677 = vmatprep.subr.mxu0 0.0
    %678 = vmatpush1.msra.mxu0 0.0
    %679 = vmatprep.subr.mxu0 0.0
    %680 = vmatpush1.msra.mxu0 0.0
    %681 = vmatprep.subr.mxu0 0.0
    %682 = vmatpush1.msra.mxu0 0.0
    %683 = vmatprep.subr.mxu0 0.0
    %684 = vmatpush1.msra.mxu0 0.0
    %685 = vmatprep.subr.mxu0 0.0
    %686 = vmatpush1.msra.mxu0 0.0
    %687 = vmatprep.subr.mxu0 0.0
    %688 = vmatpush1.msra.mxu0 0.0
    %689 = vmatprep.subr.mxu0 0.0
    %690 = vmatpush1.msra.mxu0 0.0
    %691 = vmatprep.subr.mxu0 0.0
    %692 = vmatpush1.msra.mxu0 0.0
    %693 = vmatprep.subr.mxu0 0.0
    %694 = vmatpush1.msra.mxu0 0.0
    %695 = vmatprep.subr.mxu0 0.0
    %696 = vmatpush1.msra.mxu0 0.0
    %697 = vmatprep.subr.mxu0 0.0
    %698 = vmatpush1.msra.mxu0 0.0
    %699 = vmatprep.subr.mxu0 0.0
    %700 = vmatpush1.msra.mxu0 0.0
    %701 = vmatprep.subr.mxu0 0.0
    %702 = vmatpush1.msra.mxu0 0.0
    %703 = vmatprep.subr.mxu0 0.0
    %704 = vmatpush1.msra.mxu0 0.0
    %705 = vmatprep.subr.mxu0 0.0
    %706 = vmatpush1.msra.mxu0 0.0
    %707 = vmatprep.subr.mxu0 0.0
    %708 = vmatpush1.msra.mxu0 0.0
    %709 = vmatprep.subr.mxu0 0.0
    %710 = vmatpush1.msra.mxu0 0.0
    %711 = vmatprep.subr.mxu0 0.0
    %712 = vmatpush1.msra.mxu0 0.0
    %713 = vmatprep.subr.mxu0 0.0
    %714 = vmatpush1.msra.mxu0 0.0
    %715 = vmatprep.subr.mxu0 0.0
    %716 = vmatpush1.msra.mxu0 0.0
    %717 = vmatprep.subr.mxu0 0.0
    %718 = vmatpush1.msra.mxu0 0.0
    %719 = vmatprep.subr.mxu0 0.0
    %720 = vmatpush1.msra.mxu0 0.0
    %721 = vmatprep.subr.mxu0 0.0
    %722 = vmatpush1.msra.mxu0 0.0
    %723 = vmatprep.subr.mxu0 0.0
    %724 = vmatpush1.msra.mxu0 0.0
    %725 = vmatprep.subr.mxu0 0.0
    %726 = vmatpush1.msra.mxu0 0.0
    %727 = vmatprep.subr.mxu0 0.0
    %728 = vmatpush1.msra.mxu0 0.0
    %729 = vmatprep.mubr.f32.mxu0 0.0
    %v730 = vand.u32 %v509, 4294901760
    %v731 = vsub.f32 %v509, %v730
    %732 = vmatmul.mubr.f32.gmra.mrb[0].mxu0 %v731
    %v733 = vpop.f32.mrb[0].mxu0
    %v734 = vadd.f32 %v660, %v733
    %v735 = vpop.f32.mrb[0].mxu0
    %736 = vdwg.mxu0
    %737 = vmatprep.subr.mxu0 0.0
    %v738 = vand.u32 %v50, 4294901760
    %739 = vmatpush1.msra.mxu0 %v738
    %740 = vmatprep.subr.mxu0 0.0
    %741 = vmatpush1.msra.mxu0 0.0
    %742 = vmatprep.subr.mxu0 0.0
    %743 = vmatpush1.msra.mxu0 0.0
    %744 = vmatprep.subr.mxu0 0.0
    %745 = vmatpush1.msra.mxu0 0.0
    %746 = vmatprep.subr.mxu0 0.0
    %747 = vmatpush1.msra.mxu0 0.0
    %748 = vmatprep.subr.mxu0 0.0
    %749 = vmatpush1.msra.mxu0 0.0
    %750 = vmatprep.subr.mxu0 0.0
    %751 = vmatpush1.msra.mxu0 0.0
    %752 = vmatprep.subr.mxu0 0.0
    %753 = vmatpush1.msra.mxu0 0.0
    %754 = vmatprep.subr.mxu0 0.0
    %755 = vmatpush1.msra.mxu0 0.0
    %756 = vmatprep.subr.mxu0 0.0
    %757 = vmatpush1.msra.mxu0 0.0
    %758 = vmatprep.subr.mxu0 0.0
    %759 = vmatpush1.msra.mxu0 0.0
    %760 = vmatprep.subr.mxu0 0.0
    %761 = vmatpush1.msra.mxu0 0.0
    %762 = vmatprep.subr.mxu0 0.0
    %763 = vmatpush1.msra.mxu0 0.0
    %764 = vmatprep.subr.mxu0 0.0
    %765 = vmatpush1.msra.mxu0 0.0
    %766 = vmatprep.subr.mxu0 0.0
    %767 = vmatpush1.msra.mxu0 0.0
    %768 = vmatprep.subr.mxu0 0.0
    %769 = vmatpush1.msra.mxu0 0.0
    %770 = vmatprep.subr.mxu0 0.0
    %771 = vmatpush1.msra.mxu0 0.0
    %772 = vmatprep.subr.mxu0 0.0
    %773 = vmatpush1.msra.mxu0 0.0
    %774 = vmatprep.subr.mxu0 0.0
    %775 = vmatpush1.msra.mxu0 0.0
    %776 = vmatprep.subr.mxu0 0.0
    %777 = vmatpush1.msra.mxu0 0.0
    %778 = vmatprep.subr.mxu0 0.0
    %779 = vmatpush1.msra.mxu0 0.0
    %780 = vmatprep.subr.mxu0 0.0
    %781 = vmatpush1.msra.mxu0 0.0
    %782 = vmatprep.subr.mxu0 0.0
    %783 = vmatpush1.msra.mxu0 0.0
    %784 = vmatprep.subr.mxu0 0.0
    %785 = vmatpush1.msra.mxu0 0.0
    %786 = vmatprep.subr.mxu0 0.0
    %787 = vmatpush1.msra.mxu0 0.0
    %788 = vmatprep.subr.mxu0 0.0
    %789 = vmatpush1.msra.mxu0 0.0
    %790 = vmatprep.subr.mxu0 0.0
    %791 = vmatpush1.msra.mxu0 0.0
    %792 = vmatprep.subr.mxu0 0.0
    %793 = vmatpush1.msra.mxu0 0.0
    %794 = vmatprep.subr.mxu0 0.0
    %795 = vmatpush1.msra.mxu0 0.0
    %796 = vmatprep.subr.mxu0 0.0
    %797 = vmatpush1.msra.mxu0 0.0
    %798 = vmatprep.subr.mxu0 0.0
    %799 = vmatpush1.msra.mxu0 0.0
    %800 = vmatprep.subr.mxu0 0.0
    %801 = vmatpush1.msra.mxu0 0.0
    %802 = vmatprep.mubr.f32.mxu0 0.0
    %v803 = vand.u32 %v509, 4294901760
    %v804 = vsub.f32 %v509, %v803
    %v805 = vand.u32 %v804, 4294901760
    %806 = vmatmul.mubr.f32.gmra.mrb[0].mxu0 %v805
    %v807 = vpop.f32.mrb[0].mxu0
    %v808 = vadd.f32 %v734, %v807
    %v809 = vpop.f32.mrb[0].mxu0
    %810 = vdwg.mxu0
    %811 = vmatprep.subr.mxu0 0.0
    %v812 = vand.u32 %v50, 4294901760
    %v813 = vsub.f32 %v50, %v812
    %v814 = vand.u32 %v813, 4294901760
    %815 = vmatpush1.msra.mxu0 %v814
    %816 = vmatprep.subr.mxu0 0.0
    %817 = vmatpush1.msra.mxu0 0.0
    %818 = vmatprep.subr.mxu0 0.0
    %819 = vmatpush1.msra.mxu0 0.0
    %820 = vmatprep.subr.mxu0 0.0
    %821 = vmatpush1.msra.mxu0 0.0
    %822 = vmatprep.subr.mxu0 0.0
    %823 = vmatpush1.msra.mxu0 0.0
    %824 = vmatprep.subr.mxu0 0.0
    %825 = vmatpush1.msra.mxu0 0.0
    %826 = vmatprep.subr.mxu0 0.0
    %827 = vmatpush1.msra.mxu0 0.0
    %828 = vmatprep.subr.mxu0 0.0
    %829 = vmatpush1.msra.mxu0 0.0
    %830 = vmatprep.subr.mxu0 0.0
    %831 = vmatpush1.msra.mxu0 0.0
    %832 = vmatprep.subr.mxu0 0.0
    %833 = vmatpush1.msra.mxu0 0.0
    %834 = vmatprep.subr.mxu0 0.0
    %835 = vmatpush1.msra.mxu0 0.0
    %836 = vmatprep.subr.mxu0 0.0
    %837 = vmatpush1.msra.mxu0 0.0
    %838 = vmatprep.subr.mxu0 0.0
    %839 = vmatpush1.msra.mxu0 0.0
    %840 = vmatprep.subr.mxu0 0.0
    %841 = vmatpush1.msra.mxu0 0.0
    %842 = vmatprep.subr.mxu0 0.0
    %843 = vmatpush1.msra.mxu0 0.0
    %844 = vmatprep.subr.mxu0 0.0
    %845 = vmatpush1.msra.mxu0 0.0
    %846 = vmatprep.subr.mxu0 0.0
    %847 = vmatpush1.msra.mxu0 0.0
    %848 = vmatprep.subr.mxu0 0.0
    %849 = vmatpush1.msra.mxu0 0.0
    %850 = vmatprep.subr.mxu0 0.0
    %851 = vmatpush1.msra.mxu0 0.0
    %852 = vmatprep.subr.mxu0 0.0
    %853 = vmatpush1.msra.mxu0 0.0
    %854 = vmatprep.subr.mxu0 0.0
    %855 = vmatpush1.msra.mxu0 0.0
    %856 = vmatprep.subr.mxu0 0.0
    %857 = vmatpush1.msra.mxu0 0.0
    %858 = vmatprep.subr.mxu0 0.0
    %859 = vmatpush1.msra.mxu0 0.0
    %860 = vmatprep.subr.mxu0 0.0
    %861 = vmatpush1.msra.mxu0 0.0
    %862 = vmatprep.subr.mxu0 0.0
    %863 = vmatpush1.msra.mxu0 0.0
    %864 = vmatprep.subr.mxu0 0.0
    %865 = vmatpush1.msra.mxu0 0.0
    %866 = vmatprep.subr.mxu0 0.0
    %867 = vmatpush1.msra.mxu0 0.0
    %868 = vmatprep.subr.mxu0 0.0
    %869 = vmatpush1.msra.mxu0 0.0
    %870 = vmatprep.subr.mxu0 0.0
    %871 = vmatpush1.msra.mxu0 0.0
    %872 = vmatprep.subr.mxu0 0.0
    %873 = vmatpush1.msra.mxu0 0.0
    %874 = vmatprep.subr.mxu0 0.0
    %875 = vmatpush1.msra.mxu0 0.0
    %876 = vmatprep.subr.mxu0 0.0
    %877 = vmatpush1.msra.mxu0 0.0
    %878 = vmatprep.mubr.f32.mxu0 0.0
    %v879 = vand.u32 %v509, 4294901760
    %880 = vmatmul.mubr.f32.gmra.mrb[0].mxu0 %v879
    %v881 = vpop.f32.mrb[0].mxu0
    %v882 = vadd.f32 %v808, %v881
    %v883 = vpop.f32.mrb[0].mxu0
    %884 = vdwg.mxu0
    %885 = vmatprep.subr.mxu0 0.0
    %v886 = vand.u32 %v50, 4294901760
    %887 = vmatpush1.msra.mxu0 %v886
    %888 = vmatprep.subr.mxu0 0.0
    %889 = vmatpush1.msra.mxu0 0.0
    %890 = vmatprep.subr.mxu0 0.0
    %891 = vmatpush1.msra.mxu0 0.0
    %892 = vmatprep.subr.mxu0 0.0
    %893 = vmatpush1.msra.mxu0 0.0
    %894 = vmatprep.subr.mxu0 0.0
    %895 = vmatpush1.msra.mxu0 0.0
    %896 = vmatprep.subr.mxu0 0.0
    %897 = vmatpush1.msra.mxu0 0.0
    %898 = vmatprep.subr.mxu0 0.0
    %899 = vmatpush1.msra.mxu0 0.0
    %900 = vmatprep.subr.mxu0 0.0
    %901 = vmatpush1.msra.mxu0 0.0
    %902 = vmatprep.subr.mxu0 0.0
    %903 = vmatpush1.msra.mxu0 0.0
    %904 = vmatprep.subr.mxu0 0.0
    %905 = vmatpush1.msra.mxu0 0.0
    %906 = vmatprep.subr.mxu0 0.0
    %907 = vmatpush1.msra.mxu0 0.0
    %908 = vmatprep.subr.mxu0 0.0
    %909 = vmatpush1.msra.mxu0 0.0
    %910 = vmatprep.subr.mxu0 0.0
    %911 = vmatpush1.msra.mxu0 0.0
    %912 = vmatprep.subr.mxu0 0.0
    %913 = vmatpush1.msra.mxu0 0.0
    %914 = vmatprep.subr.mxu0 0.0
    %915 = vmatpush1.msra.mxu0 0.0
    %916 = vmatprep.subr.mxu0 0.0
    %917 = vmatpush1.msra.mxu0 0.0
    %918 = vmatprep.subr.mxu0 0.0
    %919 = vmatpush1.msra.mxu0 0.0
    %920 = vmatprep.subr.mxu0 0.0
    %921 = vmatpush1.msra.mxu0 0.0
    %922 = vmatprep.subr.mxu0 0.0
    %923 = vmatpush1.msra.mxu0 0.0
    %924 = vmatprep.subr.mxu0 0.0
    %925 = vmatpush1.msra.mxu0 0.0
    %926 = vmatprep.subr.mxu0 0.0
    %927 = vmatpush1.msra.mxu0 0.0
    %928 = vmatprep.subr.mxu0 0.0
    %929 = vmatpush1.msra.mxu0 0.0
    %930 = vmatprep.subr.mxu0 0.0
    %931 = vmatpush1.msra.mxu0 0.0
    %932 = vmatprep.subr.mxu0 0.0
    %933 = vmatpush1.msra.mxu0 0.0
    %934 = vmatprep.subr.mxu0 0.0
    %935 = vmatpush1.msra.mxu0 0.0
    %936 = vmatprep.subr.mxu0 0.0
    %937 = vmatpush1.msra.mxu0 0.0
    %938 = vmatprep.subr.mxu0 0.0
    %939 = vmatpush1.msra.mxu0 0.0
    %940 = vmatprep.subr.mxu0 0.0
    %941 = vmatpush1.msra.mxu0 0.0
    %942 = vmatprep.subr.mxu0 0.0
    %943 = vmatpush1.msra.mxu0 0.0
    %944 = vmatprep.subr.mxu0 0.0
    %945 = vmatpush1.msra.mxu0 0.0
    %946 = vmatprep.subr.mxu0 0.0
    %947 = vmatpush1.msra.mxu0 0.0
    %948 = vmatprep.subr.mxu0 0.0
    %949 = vmatpush1.msra.mxu0 0.0
    %950 = vmatprep.mubr.f32.mxu0 0.0
    %v951 = vand.u32 %v509, 4294901760
    %952 = vmatmul.mubr.f32.gmra.mrb[0].mxu0 %v951
    %v953 = vpop.f32.mrb[0].mxu0
    %v954 = vadd.f32 %v882, %v953
    %v955 = vpop.f32.mrb[0].mxu0
    %956 = vdwg.mxu0
    %v957 = vld [vmem:[%s4] sm:$0x1]
    %v959 = vlaneseq
    %v960 = vshrl.u32 %v959, 7
    %v961 = vsub.s32 0, %v960
    %v962 = vrot.slane %v957, %v961
    %v964 = vadd.f32 %v954, %v962
    %v965 = vmax.f32 %v964, 0.0
    %v966 = vld [vmem:[#allocation3] sm:$0xff]
    %v967 = vld [vmem:[#allocation3 + $0x8] sm:$0xff]
    %v968 = vld [vmem:[#allocation3 + $0x10] sm:$0xff]
    %v969 = vld [vmem:[#allocation3 + $0x18] sm:$0xff]
    %v970 = vld [vmem:[#allocation3 + $0x20] sm:$0xff]
    %v971 = vld [vmem:[#allocation3 + $0x28] sm:$0xff]
    %v972 = vld [vmem:[#allocation3 + $0x30] sm:$0xff]
    %v973 = vld [vmem:[#allocation3 + $0x38] sm:$0xff]
    %v974 = vld [vmem:[%s6] sm:$0x1]
    %v976 = vlaneseq
    %v977 = vshrl.u32 %v976, 7
    %v978 = vsub.s32 0, %v977
    %v979 = vrot.slane %v974, %v978
    %vm981 = vcmask 523264
    %v983 = vsel %vm981, %v965, 0
    %985 = vmatprep.subr.mxu0 0.0
    %v986 = vand.u32 %v966, 4294901760
    %987 = vmatpush1.msra.mxu0 %v986
    %988 = vmatprep.subr.mxu0 0.0
    %v989 = vand.u32 %v967, 4294901760
    %990 = vmatpush1.msra.mxu0 %v989
    %991 = vmatprep.subr.mxu0 0.0
    %v992 = vand.u32 %v968, 4294901760
    %993 = vmatpush1.msra.mxu0 %v992
    %994 = vmatprep.subr.mxu0 0.0
    %v995 = vand.u32 %v969, 4294901760
    %996 = vmatpush1.msra.mxu0 %v995
    %997 = vmatprep.subr.mxu0 0.0
    %v998 = vand.u32 %v970, 4294901760
    %999 = vmatpush1.msra.mxu0 %v998
    %1000 = vmatprep.subr.mxu0 0.0
    %v1001 = vand.u32 %v971, 4294901760
    %1002 = vmatpush1.msra.mxu0 %v1001
    %1003 = vmatprep.subr.mxu0 0.0
    %v1004 = vand.u32 %v972, 4294901760
    %1005 = vmatpush1.msra.mxu0 %v1004
    %1006 = vmatprep.subr.mxu0 0.0
    %v1007 = vand.u32 %v973, 4294901760
    %1008 = vmatpush1.msra.mxu0 %v1007
    %1009 = vmatprep.subr.mxu0 0.0
    %1010 = vmatpush1.msra.mxu0 0.0
    %1011 = vmatprep.subr.mxu0 0.0
    %1012 = vmatpush1.msra.mxu0 0.0
    %1013 = vmatprep.subr.mxu0 0.0
    %1014 = vmatpush1.msra.mxu0 0.0
    %1015 = vmatprep.subr.mxu0 0.0
    %1016 = vmatpush1.msra.mxu0 0.0
    %1017 = vmatprep.subr.mxu0 0.0
    %1018 = vmatpush1.msra.mxu0 0.0
    %1019 = vmatprep.subr.mxu0 0.0
    %1020 = vmatpush1.msra.mxu0 0.0
    %1021 = vmatprep.subr.mxu0 0.0
    %1022 = vmatpush1.msra.mxu0 0.0
    %1023 = vmatprep.subr.mxu0 0.0
    %1024 = vmatpush1.msra.mxu0 0.0
    %1025 = vmatprep.subr.mxu0 0.0
    %1026 = vmatpush1.msra.mxu0 0.0
    %1027 = vmatprep.subr.mxu0 0.0
    %1028 = vmatpush1.msra.mxu0 0.0
    %1029 = vmatprep.subr.mxu0 0.0
    %1030 = vmatpush1.msra.mxu0 0.0
    %1031 = vmatprep.subr.mxu0 0.0
    %1032 = vmatpush1.msra.mxu0 0.0
    %1033 = vmatprep.subr.mxu0 0.0
    %1034 = vmatpush1.msra.mxu0 0.0
    %1035 = vmatprep.subr.mxu0 0.0
    %1036 = vmatpush1.msra.mxu0 0.0
    %1037 = vmatprep.subr.mxu0 0.0
    %1038 = vmatpush1.msra.mxu0 0.0
    %1039 = vmatprep.subr.mxu0 0.0
    %1040 = vmatpush1.msra.mxu0 0.0
    %1041 = vmatprep.subr.mxu0 0.0
    %1042 = vmatpush1.msra.mxu0 0.0
    %1043 = vmatprep.subr.mxu0 0.0
    %1044 = vmatpush1.msra.mxu0 0.0
    %1045 = vmatprep.subr.mxu0 0.0
    %1046 = vmatpush1.msra.mxu0 0.0
    %1047 = vmatprep.subr.mxu0 0.0
    %1048 = vmatpush1.msra.mxu0 0.0
    %1049 = vmatprep.subr.mxu0 0.0
    %1050 = vmatpush1.msra.mxu0 0.0
    %1051 = vmatprep.subr.mxu0 0.0
    %1052 = vmatpush1.msra.mxu0 0.0
    %1053 = vmatprep.subr.mxu0 0.0
    %1054 = vmatpush1.msra.mxu0 0.0
    %1055 = vmatprep.subr.mxu0 0.0
    %1056 = vmatpush1.msra.mxu0 0.0
    %1057 = vmatprep.mubr.f32.mxu0 0.0
    %v1058 = vand.u32 %v983, 4294901760
    %v1059 = vsub.f32 %v983, %v1058
    %v1060 = vand.u32 %v1059, 4294901760
    %v1061 = vsub.f32 %v1059, %v1060
    %v1062 = vand.u32 %v1061, 4294901760
    %1063 = vmatmul.mubr.f32.gmra.mrb[0].mxu0 %v1062
    %v1064 = vpop.f32.mrb[0].mxu0
    %v1065 = vadd.f32 %v979, %v1064
    %v1066 = vpop.f32.mrb[0].mxu0
    %1067 = vdwg.mxu0
    %1068 = vmatprep.subr.mxu0 0.0
    %v1069 = vand.u32 %v966, 4294901760
    %v1070 = vsub.f32 %v966, %v1069
    %v1071 = vand.u32 %v1070, 4294901760
    %v1072 = vsub.f32 %v1070, %v1071
    %v1073 = vand.u32 %v1072, 4294901760
    %1074 = vmatpush1.msra.mxu0 %v1073
    %1075 = vmatprep.subr.mxu0 0.0
    %v1076 = vand.u32 %v967, 4294901760
    %v1077 = vsub.f32 %v967, %v1076
    %v1078 = vand.u32 %v1077, 4294901760
    %v1079 = vsub.f32 %v1077, %v1078
    %v1080 = vand.u32 %v1079, 4294901760
    %1081 = vmatpush1.msra.mxu0 %v1080
    %1082 = vmatprep.subr.mxu0 0.0
    %v1083 = vand.u32 %v968, 4294901760
    %v1084 = vsub.f32 %v968, %v1083
    %v1085 = vand.u32 %v1084, 4294901760
    %v1086 = vsub.f32 %v1084, %v1085
    %v1087 = vand.u32 %v1086, 4294901760
    %1088 = vmatpush1.msra.mxu0 %v1087
    %1089 = vmatprep.subr.mxu0 0.0
    %v1090 = vand.u32 %v969, 4294901760
    %v1091 = vsub.f32 %v969, %v1090
    %v1092 = vand.u32 %v1091, 4294901760
    %v1093 = vsub.f32 %v1091, %v1092
    %v1094 = vand.u32 %v1093, 4294901760
    %1095 = vmatpush1.msra.mxu0 %v1094
    %1096 = vmatprep.subr.mxu0 0.0
    %v1097 = vand.u32 %v970, 4294901760
    %v1098 = vsub.f32 %v970, %v1097
    %v1099 = vand.u32 %v1098, 4294901760
    %v1100 = vsub.f32 %v1098, %v1099
    %v1101 = vand.u32 %v1100, 4294901760
    %1102 = vmatpush1.msra.mxu0 %v1101
    %1103 = vmatprep.subr.mxu0 0.0
    %v1104 = vand.u32 %v971, 4294901760
    %v1105 = vsub.f32 %v971, %v1104
    %v1106 = vand.u32 %v1105, 4294901760
    %v1107 = vsub.f32 %v1105, %v1106
    %v1108 = vand.u32 %v1107, 4294901760
    %1109 = vmatpush1.msra.mxu0 %v1108
    %1110 = vmatprep.subr.mxu0 0.0
    %v1111 = vand.u32 %v972, 4294901760
    %v1112 = vsub.f32 %v972, %v1111
    %v1113 = vand.u32 %v1112, 4294901760
    %v1114 = vsub.f32 %v1112, %v1113
    %v1115 = vand.u32 %v1114, 4294901760
    %1116 = vmatpush1.msra.mxu0 %v1115
    %1117 = vmatprep.subr.mxu0 0.0
    %v1118 = vand.u32 %v973, 4294901760
    %v1119 = vsub.f32 %v973, %v1118
    %v1120 = vand.u32 %v1119, 4294901760
    %v1121 = vsub.f32 %v1119, %v1120
    %v1122 = vand.u32 %v1121, 4294901760
    %1123 = vmatpush1.msra.mxu0 %v1122
    %1124 = vmatprep.subr.mxu0 0.0
    %1125 = vmatpush1.msra.mxu0 0.0
    %1126 = vmatprep.subr.mxu0 0.0
    %1127 = vmatpush1.msra.mxu0 0.0
    %1128 = vmatprep.subr.mxu0 0.0
    %1129 = vmatpush1.msra.mxu0 0.0
    %1130 = vmatprep.subr.mxu0 0.0
    %1131 = vmatpush1.msra.mxu0 0.0
    %1132 = vmatprep.subr.mxu0 0.0
    %1133 = vmatpush1.msra.mxu0 0.0
    %1134 = vmatprep.subr.mxu0 0.0
    %1135 = vmatpush1.msra.mxu0 0.0
    %1136 = vmatprep.subr.mxu0 0.0
    %1137 = vmatpush1.msra.mxu0 0.0
    %1138 = vmatprep.subr.mxu0 0.0
    %1139 = vmatpush1.msra.mxu0 0.0
    %1140 = vmatprep.subr.mxu0 0.0
    %1141 = vmatpush1.msra.mxu0 0.0
    %1142 = vmatprep.subr.mxu0 0.0
    %1143 = vmatpush1.msra.mxu0 0.0
    %1144 = vmatprep.subr.mxu0 0.0
    %1145 = vmatpush1.msra.mxu0 0.0
    %1146 = vmatprep.subr.mxu0 0.0
    %1147 = vmatpush1.msra.mxu0 0.0
    %1148 = vmatprep.subr.mxu0 0.0
    %1149 = vmatpush1.msra.mxu0 0.0
    %1150 = vmatprep.subr.mxu0 0.0
    %1151 = vmatpush1.msra.mxu0 0.0
    %1152 = vmatprep.subr.mxu0 0.0
    %1153 = vmatpush1.msra.mxu0 0.0
    %1154 = vmatprep.subr.mxu0 0.0
    %1155 = vmatpush1.msra.mxu0 0.0
    %1156 = vmatprep.subr.mxu0 0.0
    %1157 = vmatpush1.msra.mxu0 0.0
    %1158 = vmatprep.subr.mxu0 0.0
    %1159 = vmatpush1.msra.mxu0 0.0
    %1160 = vmatprep.subr.mxu0 0.0
    %1161 = vmatpush1.msra.mxu0 0.0
    %1162 = vmatprep.subr.mxu0 0.0
    %1163 = vmatpush1.msra.mxu0 0.0
    %1164 = vmatprep.subr.mxu0 0.0
    %1165 = vmatpush1.msra.mxu0 0.0
    %1166 = vmatprep.subr.mxu0 0.0
    %1167 = vmatpush1.msra.mxu0 0.0
    %1168 = vmatprep.subr.mxu0 0.0
    %1169 = vmatpush1.msra.mxu0 0.0
    %1170 = vmatprep.subr.mxu0 0.0
    %1171 = vmatpush1.msra.mxu0 0.0
    %1172 = vmatprep.mubr.f32.mxu0 0.0
    %v1173 = vand.u32 %v983, 4294901760
    %1174 = vmatmul.mubr.f32.gmra.mrb[0].mxu0 %v1173
    %v1175 = vpop.f32.mrb[0].mxu0
    %v1176 = vadd.f32 %v1065, %v1175
    %v1177 = vpop.f32.mrb[0].mxu0
    %1178 = vdwg.mxu0
    %1179 = vmatprep.subr.mxu0 0.0
    %v1180 = vand.u32 %v966, 4294901760
    %v1181 = vsub.f32 %v966, %v1180
    %1182 = vmatpush1.msra.mxu0 %v1181
    %1183 = vmatprep.subr.mxu0 0.0
    %v1184 = vand.u32 %v967, 4294901760
    %v1185 = vsub.f32 %v967, %v1184
    %1186 = vmatpush1.msra.mxu0 %v1185
    %1187 = vmatprep.subr.mxu0 0.0
    %v1188 = vand.u32 %v968, 4294901760
    %v1189 = vsub.f32 %v968, %v1188
    %1190 = vmatpush1.msra.mxu0 %v1189
    %1191 = vmatprep.subr.mxu0 0.0
    %v1192 = vand.u32 %v969, 4294901760
    %v1193 = vsub.f32 %v969, %v1192
    %1194 = vmatpush1.msra.mxu0 %v1193
    %1195 = vmatprep.subr.mxu0 0.0
    %v1196 = vand.u32 %v970, 4294901760
    %v1197 = vsub.f32 %v970, %v1196
    %1198 = vmatpush1.msra.mxu0 %v1197
    %1199 = vmatprep.subr.mxu0 0.0
    %v1200 = vand.u32 %v971, 4294901760
    %v1201 = vsub.f32 %v971, %v1200
    %1202 = vmatpush1.msra.mxu0 %v1201
    %1203 = vmatprep.subr.mxu0 0.0
    %v1204 = vand.u32 %v972, 4294901760
    %v1205 = vsub.f32 %v972, %v1204
    %1206 = vmatpush1.msra.mxu0 %v1205
    %1207 = vmatprep.subr.mxu0 0.0
    %v1208 = vand.u32 %v973, 4294901760
    %v1209 = vsub.f32 %v973, %v1208
    %1210 = vmatpush1.msra.mxu0 %v1209
    %1211 = vmatprep.subr.mxu0 0.0
    %1212 = vmatpush1.msra.mxu0 0.0
    %1213 = vmatprep.subr.mxu0 0.0
    %1214 = vmatpush1.msra.mxu0 0.0
    %1215 = vmatprep.subr.mxu0 0.0
    %1216 = vmatpush1.msra.mxu0 0.0
    %1217 = vmatprep.subr.mxu0 0.0
    %1218 = vmatpush1.msra.mxu0 0.0
    %1219 = vmatprep.subr.mxu0 0.0
    %1220 = vmatpush1.msra.mxu0 0.0
    %1221 = vmatprep.subr.mxu0 0.0
    %1222 = vmatpush1.msra.mxu0 0.0
    %1223 = vmatprep.subr.mxu0 0.0
    %1224 = vmatpush1.msra.mxu0 0.0
    %1225 = vmatprep.subr.mxu0 0.0
    %1226 = vmatpush1.msra.mxu0 0.0
    %1227 = vmatprep.subr.mxu0 0.0
    %1228 = vmatpush1.msra.mxu0 0.0
    %1229 = vmatprep.subr.mxu0 0.0
    %1230 = vmatpush1.msra.mxu0 0.0
    %1231 = vmatprep.subr.mxu0 0.0
    %1232 = vmatpush1.msra.mxu0 0.0
    %1233 = vmatprep.subr.mxu0 0.0
    %1234 = vmatpush1.msra.mxu0 0.0
    %1235 = vmatprep.subr.mxu0 0.0
    %1236 = vmatpush1.msra.mxu0 0.0
    %1237 = vmatprep.subr.mxu0 0.0
    %1238 = vmatpush1.msra.mxu0 0.0
    %1239 = vmatprep.subr.mxu0 0.0
    %1240 = vmatpush1.msra.mxu0 0.0
    %1241 = vmatprep.subr.mxu0 0.0
    %1242 = vmatpush1.msra.mxu0 0.0
    %1243 = vmatprep.subr.mxu0 0.0
    %1244 = vmatpush1.msra.mxu0 0.0
    %1245 = vmatprep.subr.mxu0 0.0
    %1246 = vmatpush1.msra.mxu0 0.0
    %1247 = vmatprep.subr.mxu0 0.0
    %1248 = vmatpush1.msra.mxu0 0.0
    %1249 = vmatprep.subr.mxu0 0.0
    %1250 = vmatpush1.msra.mxu0 0.0
    %1251 = vmatprep.subr.mxu0 0.0
    %1252 = vmatpush1.msra.mxu0 0.0
    %1253 = vmatprep.subr.mxu0 0.0
    %1254 = vmatpush1.msra.mxu0 0.0
    %1255 = vmatprep.subr.mxu0 0.0
    %1256 = vmatpush1.msra.mxu0 0.0
    %1257 = vmatprep.subr.mxu0 0.0
    %1258 = vmatpush1.msra.mxu0 0.0
    %1259 = vmatprep.mubr.f32.mxu0 0.0
    %v1260 = vand.u32 %v983, 4294901760
    %v1261 = vsub.f32 %v983, %v1260
    %1262 = vmatmul.mubr.f32.gmra.mrb[0].mxu0 %v1261
    %v1263 = vpop.f32.mrb[0].mxu0
    %v1264 = vadd.f32 %v1176, %v1263
    %v1265 = vpop.f32.mrb[0].mxu0
    %1266 = vdwg.mxu0
    %1267 = vmatprep.subr.mxu0 0.0
    %v1268 = vand.u32 %v966, 4294901760
    %1269 = vmatpush1.msra.mxu0 %v1268
    %1270 = vmatprep.subr.mxu0 0.0
    %v1271 = vand.u32 %v967, 4294901760
    %1272 = vmatpush1.msra.mxu0 %v1271
    %1273 = vmatprep.subr.mxu0 0.0
    %v1274 = vand.u32 %v968, 4294901760
    %1275 = vmatpush1.msra.mxu0 %v1274
    %1276 = vmatprep.subr.mxu0 0.0
    %v1277 = vand.u32 %v969, 4294901760
    %1278 = vmatpush1.msra.mxu0 %v1277
    %1279 = vmatprep.subr.mxu0 0.0
    %v1280 = vand.u32 %v970, 4294901760
    %1281 = vmatpush1.msra.mxu0 %v1280
    %1282 = vmatprep.subr.mxu0 0.0
    %v1283 = vand.u32 %v971, 4294901760
    %1284 = vmatpush1.msra.mxu0 %v1283
    %1285 = vmatprep.subr.mxu0 0.0
    %v1286 = vand.u32 %v972, 4294901760
    %1287 = vmatpush1.msra.mxu0 %v1286
    %1288 = vmatprep.subr.mxu0 0.0
    %v1289 = vand.u32 %v973, 4294901760
    %1290 = vmatpush1.msra.mxu0 %v1289
    %1291 = vmatprep.subr.mxu0 0.0
    %1292 = vmatpush1.msra.mxu0 0.0
    %1293 = vmatprep.subr.mxu0 0.0
    %1294 = vmatpush1.msra.mxu0 0.0
    %1295 = vmatprep.subr.mxu0 0.0
    %1296 = vmatpush1.msra.mxu0 0.0
    %1297 = vmatprep.subr.mxu0 0.0
    %1298 = vmatpush1.msra.mxu0 0.0
    %1299 = vmatprep.subr.mxu0 0.0
    %1300 = vmatpush1.msra.mxu0 0.0
    %1301 = vmatprep.subr.mxu0 0.0
    %1302 = vmatpush1.msra.mxu0 0.0
    %1303 = vmatprep.subr.mxu0 0.0
    %1304 = vmatpush1.msra.mxu0 0.0
    %1305 = vmatprep.subr.mxu0 0.0
    %1306 = vmatpush1.msra.mxu0 0.0
    %1307 = vmatprep.subr.mxu0 0.0
    %1308 = vmatpush1.msra.mxu0 0.0
    %1309 = vmatprep.subr.mxu0 0.0
    %1310 = vmatpush1.msra.mxu0 0.0
    %1311 = vmatprep.subr.mxu0 0.0
    %1312 = vmatpush1.msra.mxu0 0.0
    %1313 = vmatprep.subr.mxu0 0.0
    %1314 = vmatpush1.msra.mxu0 0.0
    %1315 = vmatprep.subr.mxu0 0.0
    %1316 = vmatpush1.msra.mxu0 0.0
    %1317 = vmatprep.subr.mxu0 0.0
    %1318 = vmatpush1.msra.mxu0 0.0
    %1319 = vmatprep.subr.mxu0 0.0
    %1320 = vmatpush1.msra.mxu0 0.0
    %1321 = vmatprep.subr.mxu0 0.0
    %1322 = vmatpush1.msra.mxu0 0.0
    %1323 = vmatprep.subr.mxu0 0.0
    %1324 = vmatpush1.msra.mxu0 0.0
    %1325 = vmatprep.subr.mxu0 0.0
    %1326 = vmatpush1.msra.mxu0 0.0
    %1327 = vmatprep.subr.mxu0 0.0
    %1328 = vmatpush1.msra.mxu0 0.0
    %1329 = vmatprep.subr.mxu0 0.0
    %1330 = vmatpush1.msra.mxu0 0.0
    %1331 = vmatprep.subr.mxu0 0.0
    %1332 = vmatpush1.msra.mxu0 0.0
    %1333 = vmatprep.subr.mxu0 0.0
    %1334 = vmatpush1.msra.mxu0 0.0
    %1335 = vmatprep.subr.mxu0 0.0
    %1336 = vmatpush1.msra.mxu0 0.0
    %1337 = vmatprep.subr.mxu0 0.0
    %1338 = vmatpush1.msra.mxu0 0.0
    %1339 = vmatprep.mubr.f32.mxu0 0.0
    %v1340 = vand.u32 %v983, 4294901760
    %v1341 = vsub.f32 %v983, %v1340
    %v1342 = vand.u32 %v1341, 4294901760
    %1343 = vmatmul.mubr.f32.gmra.mrb[0].mxu0 %v1342
    %v1344 = vpop.f32.mrb[0].mxu0
    %v1345 = vadd.f32 %v1264, %v1344
    %v1346 = vpop.f32.mrb[0].mxu0
    %1347 = vdwg.mxu0
    %1348 = vmatprep.subr.mxu0 0.0
    %v1349 = vand.u32 %v966, 4294901760
    %v1350 = vsub.f32 %v966, %v1349
    %v1351 = vand.u32 %v1350, 4294901760
    %1352 = vmatpush1.msra.mxu0 %v1351
    %1353 = vmatprep.subr.mxu0 0.0
    %v1354 = vand.u32 %v967, 4294901760
    %v1355 = vsub.f32 %v967, %v1354
    %v1356 = vand.u32 %v1355, 4294901760
    %1357 = vmatpush1.msra.mxu0 %v1356
    %1358 = vmatprep.subr.mxu0 0.0
    %v1359 = vand.u32 %v968, 4294901760
    %v1360 = vsub.f32 %v968, %v1359
    %v1361 = vand.u32 %v1360, 4294901760
    %1362 = vmatpush1.msra.mxu0 %v1361
    %1363 = vmatprep.subr.mxu0 0.0
    %v1364 = vand.u32 %v969, 4294901760
    %v1365 = vsub.f32 %v969, %v1364
    %v1366 = vand.u32 %v1365, 4294901760
    %1367 = vmatpush1.msra.mxu0 %v1366
    %1368 = vmatprep.subr.mxu0 0.0
    %v1369 = vand.u32 %v970, 4294901760
    %v1370 = vsub.f32 %v970, %v1369
    %v1371 = vand.u32 %v1370, 4294901760
    %1372 = vmatpush1.msra.mxu0 %v1371
    %1373 = vmatprep.subr.mxu0 0.0
    %v1374 = vand.u32 %v971, 4294901760
    %v1375 = vsub.f32 %v971, %v1374
    %v1376 = vand.u32 %v1375, 4294901760
    %1377 = vmatpush1.msra.mxu0 %v1376
    %1378 = vmatprep.subr.mxu0 0.0
    %v1379 = vand.u32 %v972, 4294901760
    %v1380 = vsub.f32 %v972, %v1379
    %v1381 = vand.u32 %v1380, 4294901760
    %1382 = vmatpush1.msra.mxu0 %v1381
    %1383 = vmatprep.subr.mxu0 0.0
    %v1384 = vand.u32 %v973, 4294901760
    %v1385 = vsub.f32 %v973, %v1384
    %v1386 = vand.u32 %v1385, 4294901760
    %1387 = vmatpush1.msra.mxu0 %v1386
    %1388 = vmatprep.subr.mxu0 0.0
    %1389 = vmatpush1.msra.mxu0 0.0
    %1390 = vmatprep.subr.mxu0 0.0
    %1391 = vmatpush1.msra.mxu0 0.0
    %1392 = vmatprep.subr.mxu0 0.0
    %1393 = vmatpush1.msra.mxu0 0.0
    %1394 = vmatprep.subr.mxu0 0.0
    %1395 = vmatpush1.msra.mxu0 0.0
    %1396 = vmatprep.subr.mxu0 0.0
    %1397 = vmatpush1.msra.mxu0 0.0
    %1398 = vmatprep.subr.mxu0 0.0
    %1399 = vmatpush1.msra.mxu0 0.0
    %1400 = vmatprep.subr.mxu0 0.0
    %1401 = vmatpush1.msra.mxu0 0.0
    %1402 = vmatprep.subr.mxu0 0.0
    %1403 = vmatpush1.msra.mxu0 0.0
    %1404 = vmatprep.subr.mxu0 0.0
    %1405 = vmatpush1.msra.mxu0 0.0
    %1406 = vmatprep.subr.mxu0 0.0
    %1407 = vmatpush1.msra.mxu0 0.0
    %1408 = vmatprep.subr.mxu0 0.0
    %1409 = vmatpush1.msra.mxu0 0.0
    %1410 = vmatprep.subr.mxu0 0.0
    %1411 = vmatpush1.msra.mxu0 0.0
    %1412 = vmatprep.subr.mxu0 0.0
    %1413 = vmatpush1.msra.mxu0 0.0
    %1414 = vmatprep.subr.mxu0 0.0
    %1415 = vmatpush1.msra.mxu0 0.0
    %1416 = vmatprep.subr.mxu0 0.0
    %1417 = vmatpush1.msra.mxu0 0.0
    %1418 = vmatprep.subr.mxu0 0.0
    %1419 = vmatpush1.msra.mxu0 0.0
    %1420 = vmatprep.subr.mxu0 0.0
    %1421 = vmatpush1.msra.mxu0 0.0
    %1422 = vmatprep.subr.mxu0 0.0
    %1423 = vmatpush1.msra.mxu0 0.0
    %1424 = vmatprep.subr.mxu0 0.0
    %1425 = vmatpush1.msra.mxu0 0.0
    %1426 = vmatprep.subr.mxu0 0.0
    %1427 = vmatpush1.msra.mxu0 0.0
    %1428 = vmatprep.subr.mxu0 0.0
    %1429 = vmatpush1.msra.mxu0 0.0
    %1430 = vmatprep.subr.mxu0 0.0
    %1431 = vmatpush1.msra.mxu0 0.0
    %1432 = vmatprep.subr.mxu0 0.0
    %1433 = vmatpush1.msra.mxu0 0.0
    %1434 = vmatprep.subr.mxu0 0.0
    %1435 = vmatpush1.msra.mxu0 0.0
    %1436 = vmatprep.mubr.f32.mxu0 0.0
    %v1437 = vand.u32 %v983, 4294901760
    %1438 = vmatmul.mubr.f32.gmra.mrb[0].mxu0 %v1437
    %v1439 = vpop.f32.mrb[0].mxu0
    %v1440 = vadd.f32 %v1345, %v1439
    %v1441 = vpop.f32.mrb[0].mxu0
    %1442 = vdwg.mxu0
    %1443 = vmatprep.subr.mxu0 0.0
    %v1444 = vand.u32 %v966, 4294901760
    %1445 = vmatpush1.msra.mxu0 %v1444
    %1446 = vmatprep.subr.mxu0 0.0
    %v1447 = vand.u32 %v967, 4294901760
    %1448 = vmatpush1.msra.mxu0 %v1447
    %1449 = vmatprep.subr.mxu0 0.0
    %v1450 = vand.u32 %v968, 4294901760
    %1451 = vmatpush1.msra.mxu0 %v1450
    %1452 = vmatprep.subr.mxu0 0.0
    %v1453 = vand.u32 %v969, 4294901760
    %1454 = vmatpush1.msra.mxu0 %v1453
    %1455 = vmatprep.subr.mxu0 0.0
    %v1456 = vand.u32 %v970, 4294901760
    %1457 = vmatpush1.msra.mxu0 %v1456
    %1458 = vmatprep.subr.mxu0 0.0
    %v1459 = vand.u32 %v971, 4294901760
    %1460 = vmatpush1.msra.mxu0 %v1459
    %1461 = vmatprep.subr.mxu0 0.0
    %v1462 = vand.u32 %v972, 4294901760
    %1463 = vmatpush1.msra.mxu0 %v1462
    %1464 = vmatprep.subr.mxu0 0.0
    %v1465 = vand.u32 %v973, 4294901760
    %1466 = vmatpush1.msra.mxu0 %v1465
    %1467 = vmatprep.subr.mxu0 0.0
    %1468 = vmatpush1.msra.mxu0 0.0
    %1469 = vmatprep.subr.mxu0 0.0
    %1470 = vmatpush1.msra.mxu0 0.0
    %1471 = vmatprep.subr.mxu0 0.0
    %1472 = vmatpush1.msra.mxu0 0.0
    %1473 = vmatprep.subr.mxu0 0.0
    %1474 = vmatpush1.msra.mxu0 0.0
    %1475 = vmatprep.subr.mxu0 0.0
    %1476 = vmatpush1.msra.mxu0 0.0
    %1477 = vmatprep.subr.mxu0 0.0
    %1478 = vmatpush1.msra.mxu0 0.0
    %1479 = vmatprep.subr.mxu0 0.0
    %1480 = vmatpush1.msra.mxu0 0.0
    %1481 = vmatprep.subr.mxu0 0.0
    %1482 = vmatpush1.msra.mxu0 0.0
    %1483 = vmatprep.subr.mxu0 0.0
    %1484 = vmatpush1.msra.mxu0 0.0
    %1485 = vmatprep.subr.mxu0 0.0
    %1486 = vmatpush1.msra.mxu0 0.0
    %1487 = vmatprep.subr.mxu0 0.0
    %1488 = vmatpush1.msra.mxu0 0.0
    %1489 = vmatprep.subr.mxu0 0.0
    %1490 = vmatpush1.msra.mxu0 0.0
    %1491 = vmatprep.subr.mxu0 0.0
    %1492 = vmatpush1.msra.mxu0 0.0
    %1493 = vmatprep.subr.mxu0 0.0
    %1494 = vmatpush1.msra.mxu0 0.0
    %1495 = vmatprep.subr.mxu0 0.0
    %1496 = vmatpush1.msra.mxu0 0.0
    %1497 = vmatprep.subr.mxu0 0.0
    %1498 = vmatpush1.msra.mxu0 0.0
    %1499 = vmatprep.subr.mxu0 0.0
    %1500 = vmatpush1.msra.mxu0 0.0
    %1501 = vmatprep.subr.mxu0 0.0
    %1502 = vmatpush1.msra.mxu0 0.0
    %1503 = vmatprep.subr.mxu0 0.0
    %1504 = vmatpush1.msra.mxu0 0.0
    %1505 = vmatprep.subr.mxu0 0.0
    %1506 = vmatpush1.msra.mxu0 0.0
    %1507 = vmatprep.subr.mxu0 0.0
    %1508 = vmatpush1.msra.mxu0 0.0
    %1509 = vmatprep.subr.mxu0 0.0
    %1510 = vmatpush1.msra.mxu0 0.0
    %1511 = vmatprep.subr.mxu0 0.0
    %1512 = vmatpush1.msra.mxu0 0.0
    %1513 = vmatprep.subr.mxu0 0.0
    %1514 = vmatpush1.msra.mxu0 0.0
    %1515 = vmatprep.mubr.f32.mxu0 0.0
    %v1516 = vand.u32 %v983, 4294901760
    %1517 = vmatmul.mubr.f32.gmra.mrb[0].mxu0 %v1516
    %v1518 = vpop.f32.mrb[0].mxu0
    %v1519 = vadd.f32 %v1440, %v1518
    %v1520 = vpop.f32.mrb[0].mxu0
    %1521 = vdwg.mxu0
    %v1522 = vmax.f32 %v1519, 0.0
    %v1523 = vld [vmem:[%s7] sm:$0x1]
    %v1524 = vld [vmem:[#allocation2] sm:$0x1]
    %1526 = vset.pattern.permute.xlu0 0
    %1527 = vperm.xlu0 %1526, %v1524
    %v1528 = vpop.permute.xlu0 %1527
    %v1530 = vlaneseq
    %v1531 = vshrl.u32 %v1530, 7
    %v1532 = vsub.s32 0, %v1531
    %v1533 = vrot.slane %v1528, %v1532
    %v1535 = vsel %vm981, %v1523, 0
    %v1538 = vsel %vm981, %v1522, 0
    %1540 = vmatprep.subr.mxu0 0.0
    %v1541 = vand.u32 %v1538, 4294901760
    %1542 = vmatpush1.xpose.msra.mxu0 %v1541
    %1543 = vmatprep.subr.mxu0 0.0
    %1544 = vmatpush1.xpose.msra.mxu0 0.0
    %1545 = vmatprep.subr.mxu0 0.0
    %1546 = vmatpush1.xpose.msra.mxu0 0.0
    %1547 = vmatprep.subr.mxu0 0.0
    %1548 = vmatpush1.xpose.msra.mxu0 0.0
    %1549 = vmatprep.subr.mxu0 0.0
    %1550 = vmatpush1.xpose.msra.mxu0 0.0
    %1551 = vmatprep.subr.mxu0 0.0
    %1552 = vmatpush1.xpose.msra.mxu0 0.0
    %1553 = vmatprep.subr.mxu0 0.0
    %1554 = vmatpush1.xpose.msra.mxu0 0.0
    %1555 = vmatprep.subr.mxu0 0.0
    %1556 = vmatpush1.xpose.msra.mxu0 0.0
    %1557 = vmatprep.subr.mxu0 0.0
    %1558 = vmatpush1.xpose.msra.mxu0 0.0
    %1559 = vmatprep.subr.mxu0 0.0
    %1560 = vmatpush1.xpose.msra.mxu0 0.0
    %1561 = vmatprep.subr.mxu0 0.0
    %1562 = vmatpush1.xpose.msra.mxu0 0.0
    %1563 = vmatprep.subr.mxu0 0.0
    %1564 = vmatpush1.xpose.msra.mxu0 0.0
    %1565 = vmatprep.subr.mxu0 0.0
    %1566 = vmatpush1.xpose.msra.mxu0 0.0
    %1567 = vmatprep.subr.mxu0 0.0
    %1568 = vmatpush1.xpose.msra.mxu0 0.0
    %1569 = vmatprep.subr.mxu0 0.0
    %1570 = vmatpush1.xpose.msra.mxu0 0.0
    %1571 = vmatprep.subr.mxu0 0.0
    %1572 = vmatpush1.xpose.msra.mxu0 0.0
    %1573 = vmatprep.subr.mxu0 0.0
    %1574 = vmatpush1.xpose.msra.mxu0 0.0
    %1575 = vmatprep.subr.mxu0 0.0
    %1576 = vmatpush1.xpose.msra.mxu0 0.0
    %1577 = vmatprep.subr.mxu0 0.0
    %1578 = vmatpush1.xpose.msra.mxu0 0.0
    %1579 = vmatprep.subr.mxu0 0.0
    %1580 = vmatpush1.xpose.msra.mxu0 0.0
    %1581 = vmatprep.subr.mxu0 0.0
    %1582 = vmatpush1.xpose.msra.mxu0 0.0
    %1583 = vmatprep.subr.mxu0 0.0
    %1584 = vmatpush1.xpose.msra.mxu0 0.0
    %1585 = vmatprep.subr.mxu0 0.0
    %1586 = vmatpush1.xpose.msra.mxu0 0.0
    %1587 = vmatprep.subr.mxu0 0.0
    %1588 = vmatpush1.xpose.msra.mxu0 0.0
    %1589 = vmatprep.subr.mxu0 0.0
    %1590 = vmatpush1.xpose.msra.mxu0 0.0
    %1591 = vmatprep.subr.mxu0 0.0
    %1592 = vmatpush1.xpose.msra.mxu0 0.0
    %1593 = vmatprep.subr.mxu0 0.0
    %1594 = vmatpush1.xpose.msra.mxu0 0.0
    %1595 = vmatprep.subr.mxu0 0.0
    %1596 = vmatpush1.xpose.msra.mxu0 0.0
    %1597 = vmatprep.subr.mxu0 0.0
    %1598 = vmatpush1.xpose.msra.mxu0 0.0
    %1599 = vmatprep.subr.mxu0 0.0
    %1600 = vmatpush1.xpose.msra.mxu0 0.0
    %1601 = vmatprep.subr.mxu0 0.0
    %1602 = vmatpush1.xpose.msra.mxu0 0.0
    %1603 = vmatprep.subr.mxu0 0.0
    %1604 = vmatpush1.xpose.msra.mxu0 0.0
    %1605 = vmatprep.mubr.f32.mxu0 0.0
    %v1606 = vand.u32 %v1535, 4294901760
    %v1607 = vsub.f32 %v1535, %v1606
    %v1608 = vand.u32 %v1607, 4294901760
    %v1609 = vsub.f32 %v1607, %v1608
    %v1610 = vand.u32 %v1609, 4294901760
    %1611 = vmatmul.mubr.f32.gmra.mrb[0].mxu0 %v1610
    %v1612 = vpop.f32.mrb[0].mxu0
    %v1613 = vadd.f32 %v1533, %v1612
    %v1614 = vpop.f32.mrb[0].mxu0
    %1615 = vdwg.mxu0
    %1616 = vmatprep.subr.mxu0 0.0
    %v1617 = vand.u32 %v1538, 4294901760
    %v1618 = vsub.f32 %v1538, %v1617
    %v1619 = vand.u32 %v1618, 4294901760
    %v1620 = vsub.f32 %v1618, %v1619
    %v1621 = vand.u32 %v1620, 4294901760
    %1622 = vmatpush1.xpose.msra.mxu0 %v1621
    %1623 = vmatprep.subr.mxu0 0.0
    %1624 = vmatpush1.xpose.msra.mxu0 0.0
    %1625 = vmatprep.subr.mxu0 0.0
    %1626 = vmatpush1.xpose.msra.mxu0 0.0
    %1627 = vmatprep.subr.mxu0 0.0
    %1628 = vmatpush1.xpose.msra.mxu0 0.0
    %1629 = vmatprep.subr.mxu0 0.0
    %1630 = vmatpush1.xpose.msra.mxu0 0.0
    %1631 = vmatprep.subr.mxu0 0.0
    %1632 = vmatpush1.xpose.msra.mxu0 0.0
    %1633 = vmatprep.subr.mxu0 0.0
    %1634 = vmatpush1.xpose.msra.mxu0 0.0
    %1635 = vmatprep.subr.mxu0 0.0
    %1636 = vmatpush1.xpose.msra.mxu0 0.0
    %1637 = vmatprep.subr.mxu0 0.0
    %1638 = vmatpush1.xpose.msra.mxu0 0.0
    %1639 = vmatprep.subr.mxu0 0.0
    %1640 = vmatpush1.xpose.msra.mxu0 0.0
    %1641 = vmatprep.subr.mxu0 0.0
    %1642 = vmatpush1.xpose.msra.mxu0 0.0
    %1643 = vmatprep.subr.mxu0 0.0
    %1644 = vmatpush1.xpose.msra.mxu0 0.0
    %1645 = vmatprep.subr.mxu0 0.0
    %1646 = vmatpush1.xpose.msra.mxu0 0.0
    %1647 = vmatprep.subr.mxu0 0.0
    %1648 = vmatpush1.xpose.msra.mxu0 0.0
    %1649 = vmatprep.subr.mxu0 0.0
    %1650 = vmatpush1.xpose.msra.mxu0 0.0
    %1651 = vmatprep.subr.mxu0 0.0
    %1652 = vmatpush1.xpose.msra.mxu0 0.0
    %1653 = vmatprep.subr.mxu0 0.0
    %1654 = vmatpush1.xpose.msra.mxu0 0.0
    %1655 = vmatprep.subr.mxu0 0.0
    %1656 = vmatpush1.xpose.msra.mxu0 0.0
    %1657 = vmatprep.subr.mxu0 0.0
    %1658 = vmatpush1.xpose.msra.mxu0 0.0
    %1659 = vmatprep.subr.mxu0 0.0
    %1660 = vmatpush1.xpose.msra.mxu0 0.0
    %1661 = vmatprep.subr.mxu0 0.0
    %1662 = vmatpush1.xpose.msra.mxu0 0.0
    %1663 = vmatprep.subr.mxu0 0.0
    %1664 = vmatpush1.xpose.msra.mxu0 0.0
    %1665 = vmatprep.subr.mxu0 0.0
    %1666 = vmatpush1.xpose.msra.mxu0 0.0
    %1667 = vmatprep.subr.mxu0 0.0
    %1668 = vmatpush1.xpose.msra.mxu0 0.0
    %1669 = vmatprep.subr.mxu0 0.0
    %1670 = vmatpush1.xpose.msra.mxu0 0.0
    %1671 = vmatprep.subr.mxu0 0.0
    %1672 = vmatpush1.xpose.msra.mxu0 0.0
    %1673 = vmatprep.subr.mxu0 0.0
    %1674 = vmatpush1.xpose.msra.mxu0 0.0
    %1675 = vmatprep.subr.mxu0 0.0
    %1676 = vmatpush1.xpose.msra.mxu0 0.0
    %1677 = vmatprep.subr.mxu0 0.0
    %1678 = vmatpush1.xpose.msra.mxu0 0.0
    %1679 = vmatprep.subr.mxu0 0.0
    %1680 = vmatpush1.xpose.msra.mxu0 0.0
    %1681 = vmatprep.subr.mxu0 0.0
    %1682 = vmatpush1.xpose.msra.mxu0 0.0
    %1683 = vmatprep.subr.mxu0 0.0
    %1684 = vmatpush1.xpose.msra.mxu0 0.0
    %1685 = vmatprep.mubr.f32.mxu0 0.0
    %v1686 = vand.u32 %v1535, 4294901760
    %1687 = vmatmul.mubr.f32.gmra.mrb[0].mxu0 %v1686
    %v1688 = vpop.f32.mrb[0].mxu0
    %v1689 = vadd.f32 %v1613, %v1688
    %v1690 = vpop.f32.mrb[0].mxu0
    %1691 = vdwg.mxu0
    %1692 = vmatprep.subr.mxu0 0.0
    %v1693 = vand.u32 %v1538, 4294901760
    %v1694 = vsub.f32 %v1538, %v1693
    %1695 = vmatpush1.xpose.msra.mxu0 %v1694
    %1696 = vmatprep.subr.mxu0 0.0
    %1697 = vmatpush1.xpose.msra.mxu0 0.0
    %1698 = vmatprep.subr.mxu0 0.0
    %1699 = vmatpush1.xpose.msra.mxu0 0.0
    %1700 = vmatprep.subr.mxu0 0.0
    %1701 = vmatpush1.xpose.msra.mxu0 0.0
    %1702 = vmatprep.subr.mxu0 0.0
    %1703 = vmatpush1.xpose.msra.mxu0 0.0
    %1704 = vmatprep.subr.mxu0 0.0
    %1705 = vmatpush1.xpose.msra.mxu0 0.0
    %1706 = vmatprep.subr.mxu0 0.0
    %1707 = vmatpush1.xpose.msra.mxu0 0.0
    %1708 = vmatprep.subr.mxu0 0.0
    %1709 = vmatpush1.xpose.msra.mxu0 0.0
    %1710 = vmatprep.subr.mxu0 0.0
    %1711 = vmatpush1.xpose.msra.mxu0 0.0
    %1712 = vmatprep.subr.mxu0 0.0
    %1713 = vmatpush1.xpose.msra.mxu0 0.0
    %1714 = vmatprep.subr.mxu0 0.0
    %1715 = vmatpush1.xpose.msra.mxu0 0.0
    %1716 = vmatprep.subr.mxu0 0.0
    %1717 = vmatpush1.xpose.msra.mxu0 0.0
    %1718 = vmatprep.subr.mxu0 0.0
    %1719 = vmatpush1.xpose.msra.mxu0 0.0
    %1720 = vmatprep.subr.mxu0 0.0
    %1721 = vmatpush1.xpose.msra.mxu0 0.0
    %1722 = vmatprep.subr.mxu0 0.0
    %1723 = vmatpush1.xpose.msra.mxu0 0.0
    %1724 = vmatprep.subr.mxu0 0.0
    %1725 = vmatpush1.xpose.msra.mxu0 0.0
    %1726 = vmatprep.subr.mxu0 0.0
    %1727 = vmatpush1.xpose.msra.mxu0 0.0
    %1728 = vmatprep.subr.mxu0 0.0
    %1729 = vmatpush1.xpose.msra.mxu0 0.0
    %1730 = vmatprep.subr.mxu0 0.0
    %1731 = vmatpush1.xpose.msra.mxu0 0.0
    %1732 = vmatprep.subr.mxu0 0.0
    %1733 = vmatpush1.xpose.msra.mxu0 0.0
    %1734 = vmatprep.subr.mxu0 0.0
    %1735 = vmatpush1.xpose.msra.mxu0 0.0
    %1736 = vmatprep.subr.mxu0 0.0
    %1737 = vmatpush1.xpose.msra.mxu0 0.0
    %1738 = vmatprep.subr.mxu0 0.0
    %1739 = vmatpush1.xpose.msra.mxu0 0.0
    %1740 = vmatprep.subr.mxu0 0.0
    %1741 = vmatpush1.xpose.msra.mxu0 0.0
    %1742 = vmatprep.subr.mxu0 0.0
    %1743 = vmatpush1.xpose.msra.mxu0 0.0
    %1744 = vmatprep.subr.mxu0 0.0
    %1745 = vmatpush1.xpose.msra.mxu0 0.0
    %1746 = vmatprep.subr.mxu0 0.0
    %1747 = vmatpush1.xpose.msra.mxu0 0.0
    %1748 = vmatprep.subr.mxu0 0.0
    %1749 = vmatpush1.xpose.msra.mxu0 0.0
    %1750 = vmatprep.subr.mxu0 0.0
    %1751 = vmatpush1.xpose.msra.mxu0 0.0
    %1752 = vmatprep.subr.mxu0 0.0
    %1753 = vmatpush1.xpose.msra.mxu0 0.0
    %1754 = vmatprep.subr.mxu0 0.0
    %1755 = vmatpush1.xpose.msra.mxu0 0.0
    %1756 = vmatprep.subr.mxu0 0.0
    %1757 = vmatpush1.xpose.msra.mxu0 0.0
    %1758 = vmatprep.mubr.f32.mxu0 0.0
    %v1759 = vand.u32 %v1535, 4294901760
    %v1760 = vsub.f32 %v1535, %v1759
    %1761 = vmatmul.mubr.f32.gmra.mrb[0].mxu0 %v1760
    %v1762 = vpop.f32.mrb[0].mxu0
    %v1763 = vadd.f32 %v1689, %v1762
    %v1764 = vpop.f32.mrb[0].mxu0
    %1765 = vdwg.mxu0
    %1766 = vmatprep.subr.mxu0 0.0
    %v1767 = vand.u32 %v1538, 4294901760
    %1768 = vmatpush1.xpose.msra.mxu0 %v1767
    %1769 = vmatprep.subr.mxu0 0.0
    %1770 = vmatpush1.xpose.msra.mxu0 0.0
    %1771 = vmatprep.subr.mxu0 0.0
    %1772 = vmatpush1.xpose.msra.mxu0 0.0
    %1773 = vmatprep.subr.mxu0 0.0
    %1774 = vmatpush1.xpose.msra.mxu0 0.0
    %1775 = vmatprep.subr.mxu0 0.0
    %1776 = vmatpush1.xpose.msra.mxu0 0.0
    %1777 = vmatprep.subr.mxu0 0.0
    %1778 = vmatpush1.xpose.msra.mxu0 0.0
    %1779 = vmatprep.subr.mxu0 0.0
    %1780 = vmatpush1.xpose.msra.mxu0 0.0
    %1781 = vmatprep.subr.mxu0 0.0
    %1782 = vmatpush1.xpose.msra.mxu0 0.0
    %1783 = vmatprep.subr.mxu0 0.0
    %1784 = vmatpush1.xpose.msra.mxu0 0.0
    %1785 = vmatprep.subr.mxu0 0.0
    %1786 = vmatpush1.xpose.msra.mxu0 0.0
    %1787 = vmatprep.subr.mxu0 0.0
    %1788 = vmatpush1.xpose.msra.mxu0 0.0
    %1789 = vmatprep.subr.mxu0 0.0
    %1790 = vmatpush1.xpose.msra.mxu0 0.0
    %1791 = vmatprep.subr.mxu0 0.0
    %1792 = vmatpush1.xpose.msra.mxu0 0.0
    %1793 = vmatprep.subr.mxu0 0.0
    %1794 = vmatpush1.xpose.msra.mxu0 0.0
    %1795 = vmatprep.subr.mxu0 0.0
    %1796 = vmatpush1.xpose.msra.mxu0 0.0
    %1797 = vmatprep.subr.mxu0 0.0
    %1798 = vmatpush1.xpose.msra.mxu0 0.0
    %1799 = vmatprep.subr.mxu0 0.0
    %1800 = vmatpush1.xpose.msra.mxu0 0.0
    %1801 = vmatprep.subr.mxu0 0.0
    %1802 = vmatpush1.xpose.msra.mxu0 0.0
    %1803 = vmatprep.subr.mxu0 0.0
    %1804 = vmatpush1.xpose.msra.mxu0 0.0
    %1805 = vmatprep.subr.mxu0 0.0
    %1806 = vmatpush1.xpose.msra.mxu0 0.0
    %1807 = vmatprep.subr.mxu0 0.0
    %1808 = vmatpush1.xpose.msra.mxu0 0.0
    %1809 = vmatprep.subr.mxu0 0.0
    %1810 = vmatpush1.xpose.msra.mxu0 0.0
    %1811 = vmatprep.subr.mxu0 0.0
    %1812 = vmatpush1.xpose.msra.mxu0 0.0
    %1813 = vmatprep.subr.mxu0 0.0
    %1814 = vmatpush1.xpose.msra.mxu0 0.0
    %1815 = vmatprep.subr.mxu0 0.0
    %1816 = vmatpush1.xpose.msra.mxu0 0.0
    %1817 = vmatprep.subr.mxu0 0.0
    %1818 = vmatpush1.xpose.msra.mxu0 0.0
    %1819 = vmatprep.subr.mxu0 0.0
    %1820 = vmatpush1.xpose.msra.mxu0 0.0
    %1821 = vmatprep.subr.mxu0 0.0
    %1822 = vmatpush1.xpose.msra.mxu0 0.0
    %1823 = vmatprep.subr.mxu0 0.0
    %1824 = vmatpush1.xpose.msra.mxu0 0.0
    %1825 = vmatprep.subr.mxu0 0.0
    %1826 = vmatpush1.xpose.msra.mxu0 0.0
    %1827 = vmatprep.subr.mxu0 0.0
    %1828 = vmatpush1.xpose.msra.mxu0 0.0
    %1829 = vmatprep.subr.mxu0 0.0
    %1830 = vmatpush1.xpose.msra.mxu0 0.0
    %1831 = vmatprep.mubr.f32.mxu0 0.0
    %v1832 = vand.u32 %v1535, 4294901760
    %v1833 = vsub.f32 %v1535, %v1832
    %v1834 = vand.u32 %v1833, 4294901760
    %1835 = vmatmul.mubr.f32.gmra.mrb[0].mxu0 %v1834
    %v1836 = vpop.f32.mrb[0].mxu0
    %v1837 = vadd.f32 %v1763, %v1836
    %v1838 = vpop.f32.mrb[0].mxu0
    %1839 = vdwg.mxu0
    %1840 = vmatprep.subr.mxu0 0.0
    %v1841 = vand.u32 %v1538, 4294901760
    %v1842 = vsub.f32 %v1538, %v1841
    %v1843 = vand.u32 %v1842, 4294901760
    %1844 = vmatpush1.xpose.msra.mxu0 %v1843
    %1845 = vmatprep.subr.mxu0 0.0
    %1846 = vmatpush1.xpose.msra.mxu0 0.0
    %1847 = vmatprep.subr.mxu0 0.0
    %1848 = vmatpush1.xpose.msra.mxu0 0.0
    %1849 = vmatprep.subr.mxu0 0.0
    %1850 = vmatpush1.xpose.msra.mxu0 0.0
    %1851 = vmatprep.subr.mxu0 0.0
    %1852 = vmatpush1.xpose.msra.mxu0 0.0
    %1853 = vmatprep.subr.mxu0 0.0
    %1854 = vmatpush1.xpose.msra.mxu0 0.0
    %1855 = vmatprep.subr.mxu0 0.0
    %1856 = vmatpush1.xpose.msra.mxu0 0.0
    %1857 = vmatprep.subr.mxu0 0.0
    %1858 = vmatpush1.xpose.msra.mxu0 0.0
    %1859 = vmatprep.subr.mxu0 0.0
    %1860 = vmatpush1.xpose.msra.mxu0 0.0
    %1861 = vmatprep.subr.mxu0 0.0
    %1862 = vmatpush1.xpose.msra.mxu0 0.0
    %1863 = vmatprep.subr.mxu0 0.0
    %1864 = vmatpush1.xpose.msra.mxu0 0.0
    %1865 = vmatprep.subr.mxu0 0.0
    %1866 = vmatpush1.xpose.msra.mxu0 0.0
    %1867 = vmatprep.subr.mxu0 0.0
    %1868 = vmatpush1.xpose.msra.mxu0 0.0
    %1869 = vmatprep.subr.mxu0 0.0
    %1870 = vmatpush1.xpose.msra.mxu0 0.0
    %1871 = vmatprep.subr.mxu0 0.0
    %1872 = vmatpush1.xpose.msra.mxu0 0.0
    %1873 = vmatprep.subr.mxu0 0.0
    %1874 = vmatpush1.xpose.msra.mxu0 0.0
    %1875 = vmatprep.subr.mxu0 0.0
    %1876 = vmatpush1.xpose.msra.mxu0 0.0
    %1877 = vmatprep.subr.mxu0 0.0
    %1878 = vmatpush1.xpose.msra.mxu0 0.0
    %1879 = vmatprep.subr.mxu0 0.0
    %1880 = vmatpush1.xpose.msra.mxu0 0.0
    %1881 = vmatprep.subr.mxu0 0.0
    %1882 = vmatpush1.xpose.msra.mxu0 0.0
    %1883 = vmatprep.subr.mxu0 0.0
    %1884 = vmatpush1.xpose.msra.mxu0 0.0
    %1885 = vmatprep.subr.mxu0 0.0
    %1886 = vmatpush1.xpose.msra.mxu0 0.0
    %1887 = vmatprep.subr.mxu0 0.0
    %1888 = vmatpush1.xpose.msra.mxu0 0.0
    %1889 = vmatprep.subr.mxu0 0.0
    %1890 = vmatpush1.xpose.msra.mxu0 0.0
    %1891 = vmatprep.subr.mxu0 0.0
    %1892 = vmatpush1.xpose.msra.mxu0 0.0
    %1893 = vmatprep.subr.mxu0 0.0
    %1894 = vmatpush1.xpose.msra.mxu0 0.0
    %1895 = vmatprep.subr.mxu0 0.0
    %1896 = vmatpush1.xpose.msra.mxu0 0.0
    %1897 = vmatprep.subr.mxu0 0.0
    %1898 = vmatpush1.xpose.msra.mxu0 0.0
    %1899 = vmatprep.subr.mxu0 0.0
    %1900 = vmatpush1.xpose.msra.mxu0 0.0
    %1901 = vmatprep.subr.mxu0 0.0
    %1902 = vmatpush1.xpose.msra.mxu0 0.0
    %1903 = vmatprep.subr.mxu0 0.0
    %1904 = vmatpush1.xpose.msra.mxu0 0.0
    %1905 = vmatprep.subr.mxu0 0.0
    %1906 = vmatpush1.xpose.msra.mxu0 0.0
    %1907 = vmatprep.mubr.f32.mxu0 0.0
    %v1908 = vand.u32 %v1535, 4294901760
    %1909 = vmatmul.mubr.f32.gmra.mrb[0].mxu0 %v1908
    %v1910 = vpop.f32.mrb[0].mxu0
    %v1911 = vadd.f32 %v1837, %v1910
    %v1912 = vpop.f32.mrb[0].mxu0
    %1913 = vdwg.mxu0
    %1914 = vmatprep.subr.mxu0 0.0
    %v1915 = vand.u32 %v1538, 4294901760
    %1916 = vmatpush1.xpose.msra.mxu0 %v1915
    %1917 = vmatprep.subr.mxu0 0.0
    %1918 = vmatpush1.xpose.msra.mxu0 0.0
    %1919 = vmatprep.subr.mxu0 0.0
    %1920 = vmatpush1.xpose.msra.mxu0 0.0
    %1921 = vmatprep.subr.mxu0 0.0
    %1922 = vmatpush1.xpose.msra.mxu0 0.0
    %1923 = vmatprep.subr.mxu0 0.0
    %1924 = vmatpush1.xpose.msra.mxu0 0.0
    %1925 = vmatprep.subr.mxu0 0.0
    %1926 = vmatpush1.xpose.msra.mxu0 0.0
    %1927 = vmatprep.subr.mxu0 0.0
    %1928 = vmatpush1.xpose.msra.mxu0 0.0
    %1929 = vmatprep.subr.mxu0 0.0
    %1930 = vmatpush1.xpose.msra.mxu0 0.0
    %1931 = vmatprep.subr.mxu0 0.0
    %1932 = vmatpush1.xpose.msra.mxu0 0.0
    %1933 = vmatprep.subr.mxu0 0.0
    %1934 = vmatpush1.xpose.msra.mxu0 0.0
    %1935 = vmatprep.subr.mxu0 0.0
    %1936 = vmatpush1.xpose.msra.mxu0 0.0
    %1937 = vmatprep.subr.mxu0 0.0
    %1938 = vmatpush1.xpose.msra.mxu0 0.0
    %1939 = vmatprep.subr.mxu0 0.0
    %1940 = vmatpush1.xpose.msra.mxu0 0.0
    %1941 = vmatprep.subr.mxu0 0.0
    %1942 = vmatpush1.xpose.msra.mxu0 0.0
    %1943 = vmatprep.subr.mxu0 0.0
    %1944 = vmatpush1.xpose.msra.mxu0 0.0
    %1945 = vmatprep.subr.mxu0 0.0
    %1946 = vmatpush1.xpose.msra.mxu0 0.0
    %1947 = vmatprep.subr.mxu0 0.0
    %1948 = vmatpush1.xpose.msra.mxu0 0.0
    %1949 = vmatprep.subr.mxu0 0.0
    %1950 = vmatpush1.xpose.msra.mxu0 0.0
    %1951 = vmatprep.subr.mxu0 0.0
    %1952 = vmatpush1.xpose.msra.mxu0 0.0
    %1953 = vmatprep.subr.mxu0 0.0
    %1954 = vmatpush1.xpose.msra.mxu0 0.0
    %1955 = vmatprep.subr.mxu0 0.0
    %1956 = vmatpush1.xpose.msra.mxu0 0.0
    %1957 = vmatprep.subr.mxu0 0.0
    %1958 = vmatpush1.xpose.msra.mxu0 0.0
    %1959 = vmatprep.subr.mxu0 0.0
    %1960 = vmatpush1.xpose.msra.mxu0 0.0
    %1961 = vmatprep.subr.mxu0 0.0
    %1962 = vmatpush1.xpose.msra.mxu0 0.0
    %1963 = vmatprep.subr.mxu0 0.0
    %1964 = vmatpush1.xpose.msra.mxu0 0.0
    %1965 = vmatprep.subr.mxu0 0.0
    %1966 = vmatpush1.xpose.msra.mxu0 0.0
    %1967 = vmatprep.subr.mxu0 0.0
    %1968 = vmatpush1.xpose.msra.mxu0 0.0
    %1969 = vmatprep.subr.mxu0 0.0
    %1970 = vmatpush1.xpose.msra.mxu0 0.0
    %1971 = vmatprep.subr.mxu0 0.0
    %1972 = vmatpush1.xpose.msra.mxu0 0.0
    %1973 = vmatprep.subr.mxu0 0.0
    %1974 = vmatpush1.xpose.msra.mxu0 0.0
    %1975 = vmatprep.subr.mxu0 0.0
    %1976 = vmatpush1.xpose.msra.mxu0 0.0
    %1977 = vmatprep.subr.mxu0 0.0
    %1978 = vmatpush1.xpose.msra.mxu0 0.0
    %1979 = vmatprep.mubr.f32.mxu0 0.0
    %v1980 = vand.u32 %v1535, 4294901760
    %1981 = vmatmul.mubr.f32.gmra.mrb[0].mxu0 %v1980
    %v1982 = vpop.f32.mrb[0].mxu0
    %v1983 = vadd.f32 %v1911, %v1982
    %v1984 = vpop.f32.mrb[0].mxu0
    %1985 = vdwg.mxu0
    %vm1986 = vcmask 57344
    %1987 = vst.msk [vmem:[#allocation6] sm:$0x1] %vm1986, %v1983
    // Predicated region
    $region42: #{regressor_forward.1} parent=1 // pred_check
      _
    $region43: #{regressor_forward.1} parent=1 // pred_check_branch
      %1989 = sbr.rel (0) target = $region45
    $region44: #{regressor_forward.1} parent=1 // pred_region
      %s1991 = ssub.s32 16, 16
      %1992 = vsyncadd [#allocation5], %s1991
      %s1994 = sshll.u32 [#allocation6], 4
      %s1995 = int_to_ptr.vmem [resolvable:$true] %s1994
      %1997 = dma.vmem_to_hbm [thread:$0]  %s1995, 16, %s9, [#allocation5]
    $region45: #{regressor_forward.1} parent=1 // pred_fallthru
      _
    // Predicated region
    $region46: #{regressor_forward.1} parent=1 // pred_check
      _
    $region47: #{regressor_forward.1} parent=1 // pred_check_branch
      %1999 = sbr.rel (0) target = $region49
    $region48: #{regressor_forward.1} parent=1 // pred_region
      %2000 = dma.done [#allocation5], 16
    $region49: #{regressor_forward.1} parent=1 // pred_fallthru
      _
    %2001 = vsyncpa [#allocation4], 1
    %2002 = vsyncpa [#allocation5], 1

</llo_original>
